<compile_context>
chip_gen: v7x
topology: tpu7x:2x2x1
jax: 0.10.0
libtpu: 0.0.40
codegen_flags: <defaults>
</compile_context>

<pallas_src>
import functools

import jax
import jax.numpy as jnp
import numpy as np
from jax.experimental import pallas as pl
from jax.experimental.pallas import tpu as pltpu

# ---- model hyper-params (small, consistent with the module) ----
B = 2              # batch
N = 16             # tokens per sample
C = 64             # embedding dim
NUM_HEADS = 4      # heads (C % NUM_HEADS == 0)
HD = C // NUM_HEADS
MLP_HIDDEN = int(C * 4.0)
SCALE = HD ** (-0.5)
LN_EPS = 1e-5      # PyTorch nn.LayerNorm default
BN = B * N


def block_kernel(x_ref, bias_ref,
                 g1_ref, b1_ref,            # norm1 gamma/beta           (1, C)
                 wq_ref, wk_ref,            # q/k weights (scale folded) (C, C)
                 wvp_ref,                   # folded Wv@Wproj, all heads (C, NUM_HEADS*C)
                 bproj_ref,                 # proj bias                  (1, C)
                 g2_ref, b2_ref,            # norm2 gamma/beta           (1, C)
                 w1_ref, bfc1_ref,          # fc1                        (C, H), (1, H)
                 w2_ref, bfc2_ref,          # fc2                        (H, C), (1, C)
                 o_ref):
    x = x_ref[...].astype(jnp.float32)                      # (R, C)
    bias = bias_ref[...]                                    # (R, R) additive attn bias

    # ---------------- LayerNorm 1 ----------------
    mu = jnp.mean(x, axis=-1, keepdims=True)
    var = jnp.mean((x - mu) ** 2, axis=-1, keepdims=True)
    xn = (x - mu) * jax.lax.rsqrt(var + LN_EPS) * g1_ref[...] + b1_ref[...]

    # ---------------- Attention: 3 fat matmuls + 2 small ones per head ----------------
    q_all = jnp.dot(xn, wq_ref[...], preferred_element_type=jnp.float32)    # (R, C), pre-scaled
    k_all = jnp.dot(xn, wk_ref[...], preferred_element_type=jnp.float32)    # (R, C)
    vp_all = jnp.dot(xn, wvp_ref[...], preferred_element_type=jnp.float32)  # (R, NUM_HEADS*C)

    dn = (((1,), (1,)), ((), ()))   # contract dim 1 of both -> q @ k.T on the MXU
    attn = jnp.zeros_like(x)
    for h in range(NUM_HEADS):                               # static loop; per-head temps die each iter
        q = q_all[:, h * HD:(h + 1) * HD]                    # static lane slice (R, HD)
        k = k_all[:, h * HD:(h + 1) * HD]
        s = jax.lax.dot_general(q, k, dn,
                                preferred_element_type=jnp.float32) + bias   # (R, R)
        m = jnp.max(s, axis=-1, keepdims=True)
        e = jnp.exp(s - m)
        d = jnp.sum(e, axis=-1, keepdims=True)
        r = pl.reciprocal(d, approx=True)
        r = r * (2.0 - d * r)                                # one Newton step -> ~f32 accuracy
        p = e * r                                            # softmax probs (R, R)
        attn = attn + jnp.dot(p, vp_all[:, h * C:(h + 1) * C],
                              preferred_element_type=jnp.float32)            # (R, C)

    x = x + attn + bproj_ref[...]                            # residual 1 (+ proj bias)

    # ---------------- LayerNorm 2 ----------------
    mu2 = jnp.mean(x, axis=-1, keepdims=True)
    var2 = jnp.mean((x - mu2) ** 2, axis=-1, keepdims=True)
    xn2 = (x - mu2) * jax.lax.rsqrt(var2 + LN_EPS) * g2_ref[...] + b2_ref[...]

    # ---------------- MLP (fc1 -> tanh GELU -> fc2) ----------------
    h1 = jnp.dot(xn2, w1_ref[...], preferred_element_type=jnp.float32) + bfc1_ref[...]  # (R, H)
    h1 = jax.nn.gelu(h1, approximate=True)   # tanh form -> EUP slot; < 1e-6 vs erf at these magnitudes
    h2 = jnp.dot(h1, w2_ref[...], preferred_element_type=jnp.float32) + bfc2_ref[...]   # (R, C)

    o_ref[...] = (x + h2).astype(o_ref.dtype)                # residual 2


def _full_spec(shape):
    nd = len(shape)
    return pl.BlockSpec(shape, lambda g, _nd=nd: (0,) * _nd)


@functools.partial(jax.jit, static_argnums=(2,))
def block_forward(x, prepped, grid_size):
    (g1, b1, wq, wk, wvp, bproj, g2, b2, w1, bfc1, w2, bfc2) = prepped

    x2 = x.reshape(BN, C)
    rows = BN // grid_size

    # Additive attention bias, built as a trace-time constant:
    #   grid_size == 1 : block-diagonal 0 / -1e30 (tokens only attend within their batch)
    #   grid_size == B : all zeros (each grid step sees exactly one batch element)
    rb = np.arange(rows)[:, None] // N
    cb = np.arange(rows)[None, :] // N
    bias = jnp.asarray(np.where(rb == cb, 0.0, -1e30).astype(np.float32))

    weights = (g1, b1, wq, wk, wvp, bproj, g2, b2, w1, bfc1, w2, bfc2)
    in_specs = ([pl.BlockSpec((rows, C), lambda g: (g, 0)),
                 _full_spec(bias.shape)]
                + [_full_spec(w.shape) for w in weights])

    out = pl.pallas_call(
        block_kernel,
        out_shape=jax.ShapeDtypeStruct((BN, C), x.dtype),
        grid_spec=pltpu.PrefetchScalarGridSpec(
            num_scalar_prefetch=0,
            grid=(grid_size,),
            in_specs=in_specs,
            out_specs=pl.BlockSpec((rows, C), lambda g: (g, 0)),
        ),
        compiler_params=pltpu.CompilerParams(
            dimension_semantics=("parallel",)),
    )(x2, bias, *weights)
    return out.reshape(B, N, C)


def init_params(key):
    ks = jax.random.split(key, 8)
    s = 0.02
    # LayerNorm params (PyTorch init: gamma=1, beta=0)
    g1 = jnp.ones((1, C), jnp.float32)
    b1 = jnp.zeros((1, C), jnp.float32)
    g2 = jnp.ones((1, C), jnp.float32)
    b2 = jnp.zeros((1, C), jnp.float32)
    # Linear weights stored pre-transposed as (in, out)
    wqkv = jax.random.normal(ks[0], (C, 3 * C), jnp.float32) * s   # qkv_bias=False
    wproj = jax.random.normal(ks[1], (C, C), jnp.float32) * s
    bproj = jax.random.normal(ks[2], (1, C), jnp.float32) * s
    w1 = jax.random.normal(ks[3], (C, MLP_HIDDEN), jnp.float32) * s
    bfc1 = jax.random.normal(ks[4], (1, MLP_HIDDEN), jnp.float32) * s
    w2 = jax.random.normal(ks[5], (MLP_HIDDEN, C), jnp.float32) * s
    bfc2 = jax.random.normal(ks[6], (1, C), jnp.float32) * s
    return (g1, b1, wqkv, wproj, bproj, g2, b2, w1, bfc1, w2, bfc2)


def prepare_params(params):
    """One-time weight preprocessing (runs at parameter-creation time, not per call)."""
    (g1, b1, wqkv, wproj, bproj, g2, b2, w1, bfc1, w2, bfc2) = params
    # qkv output columns are ordered (q|k|v), each head-major then head_dim minor,
    # matching the PyTorch reshape (B, N, 3, num_heads, head_dim).
    wq = wqkv[:, :C] * SCALE                      # fold the softmax scale into Wq
    wk = wqkv[:, C:2 * C]
    wv = wqkv[:, 2 * C:]
    # Fold the output projection into the value weights, per head:
    #   Wvp[h] = Wv_h (C, HD) @ Wproj_h (HD, C) -> (C, C); concat heads along lanes.
    wvp = jnp.concatenate(
        [wv[:, h * HD:(h + 1) * HD] @ wproj[h * HD:(h + 1) * HD, :]
         for h in range(NUM_HEADS)], axis=1)      # (C, NUM_HEADS * C)
    return (g1, b1, wq, wk, wvp, bproj, g2, b2, w1, bfc1, w2, bfc2)


def reference_forward(x, params):
    """Pure-JAX reference replicating the PyTorch Block forward (exact erf GELU)."""
    (g1, b1, wqkv, wproj, bproj, g2, b2, w1, bfc1, w2, bfc2) = params

    def ln(x, g, b):
        mu = jnp.mean(x, axis=-1, keepdims=True)
        var = jnp.mean((x - mu) ** 2, axis=-1, keepdims=True)
        return (x - mu) / jnp.sqrt(var + LN_EPS) * g + b

    xn = ln(x, g1, b1)
    qkv = xn @ wqkv                                          # (B, N, 3C)
    qkv = qkv.reshape(B, N, 3, NUM_HEADS, HD).transpose(2, 0, 3, 1, 4)
    q, k, v = qkv[0], qkv[1], qkv[2]                         # (B, H, N, HD)
    a = jnp.einsum('bhnd,bhmd->bhnm', q, k) * SCALE
    a = jax.nn.softmax(a, axis=-1)
    o = jnp.einsum('bhnm,bhmd->bhnd', a, v)
    o = o.transpose(0, 2, 1, 3).reshape(B, N, C)
    x = x + (o @ wproj + bproj)
    xn2 = ln(x, g2, b2)
    h = jax.nn.gelu(xn2 @ w1 + bfc1, approximate=False)
    return x + (h @ w2 + bfc2)


def _use_per_batch_grid():
    """v7x has 2 TensorCores per chip -> shard the batch across them via a parallel grid."""
    try:
        kind = jax.devices()[0].device_kind.lower()
    except Exception:
        return False
    return ("v7" in kind) or ("7x" in kind)


if __name__ == "__main__":
    key = jax.random.PRNGKey(0)
    kx, kp = jax.random.split(key)
    x = jax.random.normal(kx, (B, N, C), jnp.float32)
    params = init_params(kp)
    prepped = prepare_params(params)          # one-time weight prep (fold / split / scale)

    grid_size = B if _use_per_batch_grid() else 1

    out = block_forward(x, prepped, grid_size)
    jax.block_until_ready(out)

    ref = reference_forward(x, params)
    assert out.shape == (B, N, C)
    assert jnp.allclose(out, ref, atol=1e-4, rtol=1e-4), "mismatch vs reference"
    print("KERNEL_OK")
</pallas_src>

<mosaic_0001>
module attributes {stable_mosaic.version = 11 : i64} {
  func.func @block_kernel(%arg0: i32, %arg1: memref<32x64xf32, #tpu.memory_space<vmem>>, %arg2: memref<32x32xf32, #tpu.memory_space<vmem>>, %arg3: memref<1x64xf32, #tpu.memory_space<vmem>>, %arg4: memref<1x64xf32, #tpu.memory_space<vmem>>, %arg5: memref<64x64xf32, #tpu.memory_space<vmem>>, %arg6: memref<64x64xf32, #tpu.memory_space<vmem>>, %arg7: memref<64x256xf32, #tpu.memory_space<vmem>>, %arg8: memref<1x64xf32, #tpu.memory_space<vmem>>, %arg9: memref<1x64xf32, #tpu.memory_space<vmem>>, %arg10: memref<1x64xf32, #tpu.memory_space<vmem>>, %arg11: memref<64x256xf32, #tpu.memory_space<vmem>>, %arg12: memref<1x256xf32, #tpu.memory_space<vmem>>, %arg13: memref<256x64xf32, #tpu.memory_space<vmem>>, %arg14: memref<1x64xf32, #tpu.memory_space<vmem>>, %arg15: memref<32x64xf32, #tpu.memory_space<vmem>>) attributes {dimension_semantics = [#tpu.dimension_semantics<parallel>], iteration_bounds = array<i64: 1>, scalar_prefetch = 0 : i64, scratch_operands = 0 : i64, tpu.core_type = #tpu.core_type<tc>, window_params = [{transform_indices = @transform_0, window_bounds = array<i64: 32, 64>}, {pipeline_mode = #tpu.pipeline_mode<synchronous>, transform_indices = @transform_1, window_bounds = array<i64: 32, 32>}, {pipeline_mode = #tpu.pipeline_mode<synchronous>, transform_indices = @transform_2, window_bounds = array<i64: 1, 64>}, {pipeline_mode = #tpu.pipeline_mode<synchronous>, transform_indices = @transform_3, window_bounds = array<i64: 1, 64>}, {pipeline_mode = #tpu.pipeline_mode<synchronous>, transform_indices = @transform_4, window_bounds = array<i64: 64, 64>}, {pipeline_mode = #tpu.pipeline_mode<synchronous>, transform_indices = @transform_5, window_bounds = array<i64: 64, 64>}, {pipeline_mode = #tpu.pipeline_mode<synchronous>, transform_indices = @transform_6, window_bounds = array<i64: 64, 256>}, {pipeline_mode = #tpu.pipeline_mode<synchronous>, transform_indices = @transform_7, window_bounds = array<i64: 1, 64>}, {pipeline_mode = #tpu.pipeline_mode<synchronous>, transform_indices = @transform_8, window_bounds = array<i64: 1, 64>}, {pipeline_mode = #tpu.pipeline_mode<synchronous>, transform_indices = @transform_9, window_bounds = array<i64: 1, 64>}, {pipeline_mode = #tpu.pipeline_mode<synchronous>, transform_indices = @transform_10, window_bounds = array<i64: 64, 256>}, {pipeline_mode = #tpu.pipeline_mode<synchronous>, transform_indices = @transform_11, window_bounds = array<i64: 1, 256>}, {pipeline_mode = #tpu.pipeline_mode<synchronous>, transform_indices = @transform_12, window_bounds = array<i64: 256, 64>}, {pipeline_mode = #tpu.pipeline_mode<synchronous>, transform_indices = @transform_13, window_bounds = array<i64: 1, 64>}, {transform_indices = @transform_14, window_bounds = array<i64: 32, 64>}]} {
    %c0 = arith.constant 0 : index
    %c0_0 = arith.constant 0 : index
    %0 = vector.load %arg1[%c0, %c0_0] : memref<32x64xf32, #tpu.memory_space<vmem>>, vector<32x64xf32>
    %c0_1 = arith.constant 0 : index
    %c0_2 = arith.constant 0 : index
    %1 = vector.load %arg2[%c0_1, %c0_2] : memref<32x32xf32, #tpu.memory_space<vmem>>, vector<32x32xf32>
    %cst = arith.constant dense<0.000000e+00> : vector<32xf32>
    %2 = vector.multi_reduction <add>, %0, %cst [1] : vector<32x64xf32> to vector<32xf32>
    %3 = vector.shape_cast %2 : vector<32xf32> to vector<32x1xf32>
    %cst_3 = arith.constant 6.400000e+01 : f32
    %4 = vector.broadcast %cst_3 : f32 to vector<32x1xf32>
    %5 = arith.divf %3, %4 : vector<32x1xf32>
    %6 = vector.broadcast %5 : vector<32x1xf32> to vector<32x64xf32>
    %7 = arith.subf %0, %6 : vector<32x64xf32>
    %8 = arith.mulf %7, %7 : vector<32x64xf32>
    %cst_4 = arith.constant dense<0.000000e+00> : vector<32xf32>
    %9 = vector.multi_reduction <add>, %8, %cst_4 [1] : vector<32x64xf32> to vector<32xf32>
    %10 = vector.shape_cast %9 : vector<32xf32> to vector<32x1xf32>
    %cst_5 = arith.constant 6.400000e+01 : f32
    %11 = vector.broadcast %cst_5 : f32 to vector<32x1xf32>
    %12 = arith.divf %10, %11 : vector<32x1xf32>
    %13 = vector.broadcast %5 : vector<32x1xf32> to vector<32x64xf32>
    %14 = arith.subf %0, %13 : vector<32x64xf32>
    %cst_6 = arith.constant 9.99999974E-6 : f32
    %15 = vector.broadcast %cst_6 : f32 to vector<32x1xf32>
    %16 = arith.addf %12, %15 : vector<32x1xf32>
    %17 = math.rsqrt %16 : vector<32x1xf32>
    %18 = vector.broadcast %17 : vector<32x1xf32> to vector<32x64xf32>
    %19 = arith.mulf %14, %18 : vector<32x64xf32>
    %c0_7 = arith.constant 0 : index
    %c0_8 = arith.constant 0 : index
    %20 = vector.load %arg3[%c0_7, %c0_8] : memref<1x64xf32, #tpu.memory_space<vmem>>, vector<1x64xf32>
    %21 = vector.broadcast %20 : vector<1x64xf32> to vector<32x64xf32>
    %22 = arith.mulf %19, %21 : vector<32x64xf32>
    %c0_9 = arith.constant 0 : index
    %c0_10 = arith.constant 0 : index
    %23 = vector.load %arg4[%c0_9, %c0_10] : memref<1x64xf32, #tpu.memory_space<vmem>>, vector<1x64xf32>
    %24 = vector.broadcast %23 : vector<1x64xf32> to vector<32x64xf32>
    %25 = arith.addf %22, %24 : vector<32x64xf32>
    %c0_11 = arith.constant 0 : index
    %c0_12 = arith.constant 0 : index
    %26 = vector.load %arg5[%c0_11, %c0_12] : memref<64x64xf32, #tpu.memory_space<vmem>>, vector<64x64xf32>
    %cst_13 = arith.constant dense<0.000000e+00> : vector<32x64xf32>
    %27 = tpu.matmul %25, %26, %cst_13 {dimension_numbers = #tpu.dot_dimension_numbers<[1], [0], [0], [1], [0, 0, 1, 1], [], []>} : vector<32x64xf32>, vector<64x64xf32>, vector<32x64xf32> -> vector<32x64xf32>
    %c0_14 = arith.constant 0 : index
    %c0_15 = arith.constant 0 : index
    %28 = vector.load %arg6[%c0_14, %c0_15] : memref<64x64xf32, #tpu.memory_space<vmem>>, vector<64x64xf32>
    %cst_16 = arith.constant dense<0.000000e+00> : vector<32x64xf32>
    %29 = tpu.matmul %25, %28, %cst_16 {dimension_numbers = #tpu.dot_dimension_numbers<[1], [0], [0], [1], [0, 0, 1, 1], [], []>} : vector<32x64xf32>, vector<64x64xf32>, vector<32x64xf32> -> vector<32x64xf32>
    %c0_17 = arith.constant 0 : index
    %c0_18 = arith.constant 0 : index
    %30 = vector.load %arg7[%c0_17, %c0_18] : memref<64x256xf32, #tpu.memory_space<vmem>>, vector<64x256xf32>
    %cst_19 = arith.constant dense<0.000000e+00> : vector<32x256xf32>
    %31 = tpu.matmul %25, %30, %cst_19 {dimension_numbers = #tpu.dot_dimension_numbers<[1], [0], [0], [1], [0, 0, 1, 1], [], []>} : vector<32x64xf32>, vector<64x256xf32>, vector<32x256xf32> -> vector<32x256xf32>
    %cst_20 = arith.constant 0.000000e+00 : f32
    %32 = vector.broadcast %cst_20 : f32 to vector<32x64xf32>
    %33 = vector.extract_strided_slice %27 {offsets = [0, 0], sizes = [32, 16], strides = [1, 1]} : vector<32x64xf32> to vector<32x16xf32>
    %34 = vector.extract_strided_slice %29 {offsets = [0, 0], sizes = [32, 16], strides = [1, 1]} : vector<32x64xf32> to vector<32x16xf32>
    %cst_21 = arith.constant dense<0.000000e+00> : vector<32x32xf32>
    %35 = tpu.matmul %33, %34, %cst_21 {dimension_numbers = #tpu.dot_dimension_numbers<[1], [1], [0], [0], [0, 0, 1, 0], [], []>} : vector<32x16xf32>, vector<32x16xf32>, vector<32x32xf32> -> vector<32x32xf32>
    %36 = arith.addf %35, %1 : vector<32x32xf32>
    %cst_22 = arith.constant dense<0xFF800000> : vector<32xf32>
    %37 = vector.multi_reduction <maximumf>, %36, %cst_22 [1] : vector<32x32xf32> to vector<32xf32>
    %38 = vector.shape_cast %37 : vector<32xf32> to vector<32x1xf32>
    %39 = vector.broadcast %38 : vector<32x1xf32> to vector<32x32xf32>
    %40 = arith.subf %36, %39 : vector<32x32xf32>
    %41 = math.exp %40 : vector<32x32xf32>
    %cst_23 = arith.constant dense<0.000000e+00> : vector<32xf32>
    %42 = vector.multi_reduction <add>, %41, %cst_23 [1] : vector<32x32xf32> to vector<32xf32>
    %43 = vector.shape_cast %42 : vector<32xf32> to vector<32x1xf32>
    %44 = tpu.reciprocal %43 {approx = true} : vector<32x1xf32> -> vector<32x1xf32>
    %45 = arith.mulf %43, %44 : vector<32x1xf32>
    %cst_24 = arith.constant 2.000000e+00 : f32
    %46 = vector.broadcast %cst_24 : f32 to vector<32x1xf32>
    %47 = arith.subf %46, %45 : vector<32x1xf32>
    %48 = arith.mulf %44, %47 : vector<32x1xf32>
    %49 = vector.broadcast %48 : vector<32x1xf32> to vector<32x32xf32>
    %50 = arith.mulf %41, %49 : vector<32x32xf32>
    %51 = vector.extract_strided_slice %31 {offsets = [0, 0], sizes = [32, 64], strides = [1, 1]} : vector<32x256xf32> to vector<32x64xf32>
    %cst_25 = arith.constant dense<0.000000e+00> : vector<32x64xf32>
    %52 = tpu.matmul %50, %51, %cst_25 {dimension_numbers = #tpu.dot_dimension_numbers<[1], [0], [0], [1], [0, 0, 1, 1], [], []>} : vector<32x32xf32>, vector<32x64xf32>, vector<32x64xf32> -> vector<32x64xf32>
    %53 = arith.addf %32, %52 : vector<32x64xf32>
    %54 = vector.extract_strided_slice %27 {offsets = [0, 16], sizes = [32, 16], strides = [1, 1]} : vector<32x64xf32> to vector<32x16xf32>
    %55 = vector.extract_strided_slice %29 {offsets = [0, 16], sizes = [32, 16], strides = [1, 1]} : vector<32x64xf32> to vector<32x16xf32>
    %cst_26 = arith.constant dense<0.000000e+00> : vector<32x32xf32>
    %56 = tpu.matmul %54, %55, %cst_26 {dimension_numbers = #tpu.dot_dimension_numbers<[1], [1], [0], [0], [0, 0, 1, 0], [], []>} : vector<32x16xf32>, vector<32x16xf32>, vector<32x32xf32> -> vector<32x32xf32>
    %57 = arith.addf %56, %1 : vector<32x32xf32>
    %cst_27 = arith.constant dense<0xFF800000> : vector<32xf32>
    %58 = vector.multi_reduction <maximumf>, %57, %cst_27 [1] : vector<32x32xf32> to vector<32xf32>
    %59 = vector.shape_cast %58 : vector<32xf32> to vector<32x1xf32>
    %60 = vector.broadcast %59 : vector<32x1xf32> to vector<32x32xf32>
    %61 = arith.subf %57, %60 : vector<32x32xf32>
    %62 = math.exp %61 : vector<32x32xf32>
    %cst_28 = arith.constant dense<0.000000e+00> : vector<32xf32>
    %63 = vector.multi_reduction <add>, %62, %cst_28 [1] : vector<32x32xf32> to vector<32xf32>
    %64 = vector.shape_cast %63 : vector<32xf32> to vector<32x1xf32>
    %65 = tpu.reciprocal %64 {approx = true} : vector<32x1xf32> -> vector<32x1xf32>
    %66 = arith.mulf %64, %65 : vector<32x1xf32>
    %cst_29 = arith.constant 2.000000e+00 : f32
    %67 = vector.broadcast %cst_29 : f32 to vector<32x1xf32>
    %68 = arith.subf %67, %66 : vector<32x1xf32>
    %69 = arith.mulf %65, %68 : vector<32x1xf32>
    %70 = vector.broadcast %69 : vector<32x1xf32> to vector<32x32xf32>
    %71 = arith.mulf %62, %70 : vector<32x32xf32>
    %72 = vector.extract_strided_slice %31 {offsets = [0, 64], sizes = [32, 64], strides = [1, 1]} : vector<32x256xf32> to vector<32x64xf32>
    %cst_30 = arith.constant dense<0.000000e+00> : vector<32x64xf32>
    %73 = tpu.matmul %71, %72, %cst_30 {dimension_numbers = #tpu.dot_dimension_numbers<[1], [0], [0], [1], [0, 0, 1, 1], [], []>} : vector<32x32xf32>, vector<32x64xf32>, vector<32x64xf32> -> vector<32x64xf32>
    %74 = arith.addf %53, %73 : vector<32x64xf32>
    %75 = vector.extract_strided_slice %27 {offsets = [0, 32], sizes = [32, 16], strides = [1, 1]} : vector<32x64xf32> to vector<32x16xf32>
    %76 = vector.extract_strided_slice %29 {offsets = [0, 32], sizes = [32, 16], strides = [1, 1]} : vector<32x64xf32> to vector<32x16xf32>
    %cst_31 = arith.constant dense<0.000000e+00> : vector<32x32xf32>
    %77 = tpu.matmul %75, %76, %cst_31 {dimension_numbers = #tpu.dot_dimension_numbers<[1], [1], [0], [0], [0, 0, 1, 0], [], []>} : vector<32x16xf32>, vector<32x16xf32>, vector<32x32xf32> -> vector<32x32xf32>
    %78 = arith.addf %77, %1 : vector<32x32xf32>
    %cst_32 = arith.constant dense<0xFF800000> : vector<32xf32>
    %79 = vector.multi_reduction <maximumf>, %78, %cst_32 [1] : vector<32x32xf32> to vector<32xf32>
    %80 = vector.shape_cast %79 : vector<32xf32> to vector<32x1xf32>
    %81 = vector.broadcast %80 : vector<32x1xf32> to vector<32x32xf32>
    %82 = arith.subf %78, %81 : vector<32x32xf32>
    %83 = math.exp %82 : vector<32x32xf32>
    %cst_33 = arith.constant dense<0.000000e+00> : vector<32xf32>
    %84 = vector.multi_reduction <add>, %83, %cst_33 [1] : vector<32x32xf32> to vector<32xf32>
    %85 = vector.shape_cast %84 : vector<32xf32> to vector<32x1xf32>
    %86 = tpu.reciprocal %85 {approx = true} : vector<32x1xf32> -> vector<32x1xf32>
    %87 = arith.mulf %85, %86 : vector<32x1xf32>
    %cst_34 = arith.constant 2.000000e+00 : f32
    %88 = vector.broadcast %cst_34 : f32 to vector<32x1xf32>
    %89 = arith.subf %88, %87 : vector<32x1xf32>
    %90 = arith.mulf %86, %89 : vector<32x1xf32>
    %91 = vector.broadcast %90 : vector<32x1xf32> to vector<32x32xf32>
    %92 = arith.mulf %83, %91 : vector<32x32xf32>
    %93 = vector.extract_strided_slice %31 {offsets = [0, 128], sizes = [32, 64], strides = [1, 1]} : vector<32x256xf32> to vector<32x64xf32>
    %cst_35 = arith.constant dense<0.000000e+00> : vector<32x64xf32>
    %94 = tpu.matmul %92, %93, %cst_35 {dimension_numbers = #tpu.dot_dimension_numbers<[1], [0], [0], [1], [0, 0, 1, 1], [], []>} : vector<32x32xf32>, vector<32x64xf32>, vector<32x64xf32> -> vector<32x64xf32>
    %95 = arith.addf %74, %94 : vector<32x64xf32>
    %96 = vector.extract_strided_slice %27 {offsets = [0, 48], sizes = [32, 16], strides = [1, 1]} : vector<32x64xf32> to vector<32x16xf32>
    %97 = vector.extract_strided_slice %29 {offsets = [0, 48], sizes = [32, 16], strides = [1, 1]} : vector<32x64xf32> to vector<32x16xf32>
    %cst_36 = arith.constant dense<0.000000e+00> : vector<32x32xf32>
    %98 = tpu.matmul %96, %97, %cst_36 {dimension_numbers = #tpu.dot_dimension_numbers<[1], [1], [0], [0], [0, 0, 1, 0], [], []>} : vector<32x16xf32>, vector<32x16xf32>, vector<32x32xf32> -> vector<32x32xf32>
    %99 = arith.addf %98, %1 : vector<32x32xf32>
    %cst_37 = arith.constant dense<0xFF800000> : vector<32xf32>
    %100 = vector.multi_reduction <maximumf>, %99, %cst_37 [1] : vector<32x32xf32> to vector<32xf32>
    %101 = vector.shape_cast %100 : vector<32xf32> to vector<32x1xf32>
    %102 = vector.broadcast %101 : vector<32x1xf32> to vector<32x32xf32>
    %103 = arith.subf %99, %102 : vector<32x32xf32>
    %104 = math.exp %103 : vector<32x32xf32>
    %cst_38 = arith.constant dense<0.000000e+00> : vector<32xf32>
    %105 = vector.multi_reduction <add>, %104, %cst_38 [1] : vector<32x32xf32> to vector<32xf32>
    %106 = vector.shape_cast %105 : vector<32xf32> to vector<32x1xf32>
    %107 = tpu.reciprocal %106 {approx = true} : vector<32x1xf32> -> vector<32x1xf32>
    %108 = arith.mulf %106, %107 : vector<32x1xf32>
    %cst_39 = arith.constant 2.000000e+00 : f32
    %109 = vector.broadcast %cst_39 : f32 to vector<32x1xf32>
    %110 = arith.subf %109, %108 : vector<32x1xf32>
    %111 = arith.mulf %107, %110 : vector<32x1xf32>
    %112 = vector.broadcast %111 : vector<32x1xf32> to vector<32x32xf32>
    %113 = arith.mulf %104, %112 : vector<32x32xf32>
    %114 = vector.extract_strided_slice %31 {offsets = [0, 192], sizes = [32, 64], strides = [1, 1]} : vector<32x256xf32> to vector<32x64xf32>
    %cst_40 = arith.constant dense<0.000000e+00> : vector<32x64xf32>
    %115 = tpu.matmul %113, %114, %cst_40 {dimension_numbers = #tpu.dot_dimension_numbers<[1], [0], [0], [1], [0, 0, 1, 1], [], []>} : vector<32x32xf32>, vector<32x64xf32>, vector<32x64xf32> -> vector<32x64xf32>
    %116 = arith.addf %95, %115 : vector<32x64xf32>
    %117 = arith.addf %0, %116 : vector<32x64xf32>
    %c0_41 = arith.constant 0 : index
    %c0_42 = arith.constant 0 : index
    %118 = vector.load %arg8[%c0_41, %c0_42] : memref<1x64xf32, #tpu.memory_space<vmem>>, vector<1x64xf32>
    %119 = vector.broadcast %118 : vector<1x64xf32> to vector<32x64xf32>
    %120 = arith.addf %117, %119 : vector<32x64xf32>
    %cst_43 = arith.constant dense<0.000000e+00> : vector<32xf32>
    %121 = vector.multi_reduction <add>, %120, %cst_43 [1] : vector<32x64xf32> to vector<32xf32>
    %122 = vector.shape_cast %121 : vector<32xf32> to vector<32x1xf32>
    %cst_44 = arith.constant 6.400000e+01 : f32
    %123 = vector.broadcast %cst_44 : f32 to vector<32x1xf32>
    %124 = arith.divf %122, %123 : vector<32x1xf32>
    %125 = vector.broadcast %124 : vector<32x1xf32> to vector<32x64xf32>
    %126 = arith.subf %120, %125 : vector<32x64xf32>
    %127 = arith.mulf %126, %126 : vector<32x64xf32>
    %cst_45 = arith.constant dense<0.000000e+00> : vector<32xf32>
    %128 = vector.multi_reduction <add>, %127, %cst_45 [1] : vector<32x64xf32> to vector<32xf32>
    %129 = vector.shape_cast %128 : vector<32xf32> to vector<32x1xf32>
    %cst_46 = arith.constant 6.400000e+01 : f32
    %130 = vector.broadcast %cst_46 : f32 to vector<32x1xf32>
    %131 = arith.divf %129, %130 : vector<32x1xf32>
    %132 = vector.broadcast %124 : vector<32x1xf32> to vector<32x64xf32>
    %133 = arith.subf %120, %132 : vector<32x64xf32>
    %cst_47 = arith.constant 9.99999974E-6 : f32
    %134 = vector.broadcast %cst_47 : f32 to vector<32x1xf32>
    %135 = arith.addf %131, %134 : vector<32x1xf32>
    %136 = math.rsqrt %135 : vector<32x1xf32>
    %137 = vector.broadcast %136 : vector<32x1xf32> to vector<32x64xf32>
    %138 = arith.mulf %133, %137 : vector<32x64xf32>
    %c0_48 = arith.constant 0 : index
    %c0_49 = arith.constant 0 : index
    %139 = vector.load %arg9[%c0_48, %c0_49] : memref<1x64xf32, #tpu.memory_space<vmem>>, vector<1x64xf32>
    %140 = vector.broadcast %139 : vector<1x64xf32> to vector<32x64xf32>
    %141 = arith.mulf %138, %140 : vector<32x64xf32>
    %c0_50 = arith.constant 0 : index
    %c0_51 = arith.constant 0 : index
    %142 = vector.load %arg10[%c0_50, %c0_51] : memref<1x64xf32, #tpu.memory_space<vmem>>, vector<1x64xf32>
    %143 = vector.broadcast %142 : vector<1x64xf32> to vector<32x64xf32>
    %144 = arith.addf %141, %143 : vector<32x64xf32>
    %c0_52 = arith.constant 0 : index
    %c0_53 = arith.constant 0 : index
    %145 = vector.load %arg11[%c0_52, %c0_53] : memref<64x256xf32, #tpu.memory_space<vmem>>, vector<64x256xf32>
    %cst_54 = arith.constant dense<0.000000e+00> : vector<32x256xf32>
    %146 = tpu.matmul %144, %145, %cst_54 {dimension_numbers = #tpu.dot_dimension_numbers<[1], [0], [0], [1], [0, 0, 1, 1], [], []>} : vector<32x64xf32>, vector<64x256xf32>, vector<32x256xf32> -> vector<32x256xf32>
    %c0_55 = arith.constant 0 : index
    %c0_56 = arith.constant 0 : index
    %147 = vector.load %arg12[%c0_55, %c0_56] : memref<1x256xf32, #tpu.memory_space<vmem>>, vector<1x256xf32>
    %148 = vector.broadcast %147 : vector<1x256xf32> to vector<32x256xf32>
    %149 = arith.addf %146, %148 : vector<32x256xf32>
    %150 = arith.mulf %149, %149 : vector<32x256xf32>
    %151 = arith.mulf %149, %150 : vector<32x256xf32>
    %cst_57 = arith.constant 4.471500e-02 : f32
    %152 = vector.broadcast %cst_57 : f32 to vector<32x256xf32>
    %153 = arith.mulf %152, %151 : vector<32x256xf32>
    %154 = arith.addf %149, %153 : vector<32x256xf32>
    %cst_58 = arith.constant 0.797884583 : f32
    %155 = vector.broadcast %cst_58 : f32 to vector<32x256xf32>
    %156 = arith.mulf %155, %154 : vector<32x256xf32>
    %157 = math.tanh %156 : vector<32x256xf32>
    %cst_59 = arith.constant 1.000000e+00 : f32
    %158 = vector.broadcast %cst_59 : f32 to vector<32x256xf32>
    %159 = arith.addf %158, %157 : vector<32x256xf32>
    %cst_60 = arith.constant 5.000000e-01 : f32
    %160 = vector.broadcast %cst_60 : f32 to vector<32x256xf32>
    %161 = arith.mulf %160, %159 : vector<32x256xf32>
    %162 = arith.mulf %149, %161 : vector<32x256xf32>
    %c0_61 = arith.constant 0 : index
    %c0_62 = arith.constant 0 : index
    %163 = vector.load %arg13[%c0_61, %c0_62] : memref<256x64xf32, #tpu.memory_space<vmem>>, vector<256x64xf32>
    %cst_63 = arith.constant dense<0.000000e+00> : vector<32x64xf32>
    %164 = tpu.matmul %162, %163, %cst_63 {dimension_numbers = #tpu.dot_dimension_numbers<[1], [0], [0], [1], [0, 0, 1, 1], [], []>} : vector<32x256xf32>, vector<256x64xf32>, vector<32x64xf32> -> vector<32x64xf32>
    %c0_64 = arith.constant 0 : index
    %c0_65 = arith.constant 0 : index
    %165 = vector.load %arg14[%c0_64, %c0_65] : memref<1x64xf32, #tpu.memory_space<vmem>>, vector<1x64xf32>
    %166 = vector.broadcast %165 : vector<1x64xf32> to vector<32x64xf32>
    %167 = arith.addf %164, %166 : vector<32x64xf32>
    %168 = arith.addf %120, %167 : vector<32x64xf32>
    %c0_66 = arith.constant 0 : index
    %c0_67 = arith.constant 0 : index
    %169 = vector.load %arg15[%c0_66, %c0_67] : memref<32x64xf32, #tpu.memory_space<vmem>>, vector<32x64xf32>
    tpu.vector_store %arg15[%c0_66, %c0_67], %168 {strides = array<i32>} : memref<32x64xf32, #tpu.memory_space<vmem>>, vector<32x64xf32>,
    return
  }
  func.func @transform_0(%arg0: i32) -> (i32, i32) {
    %c0_i32 = arith.constant 0 : i32
    %c0_i32_0 = arith.constant 0 : i32
    return %arg0, %c0_i32 : i32, i32
  }
  func.func @transform_1(%arg0: i32) -> (i32, i32) {
    %c0_i32 = arith.constant 0 : i32
    %c0_i32_0 = arith.constant 0 : i32
    %c0_i32_1 = arith.constant 0 : i32
    return %c0_i32, %c0_i32_0 : i32, i32
  }
  func.func @transform_2(%arg0: i32) -> (i32, i32) {
    %c0_i32 = arith.constant 0 : i32
    %c0_i32_0 = arith.constant 0 : i32
    %c0_i32_1 = arith.constant 0 : i32
    return %c0_i32, %c0_i32_0 : i32, i32
  }
  func.func @transform_3(%arg0: i32) -> (i32, i32) {
    %c0_i32 = arith.constant 0 : i32
    %c0_i32_0 = arith.constant 0 : i32
    %c0_i32_1 = arith.constant 0 : i32
    return %c0_i32, %c0_i32_0 : i32, i32
  }
  func.func @transform_4(%arg0: i32) -> (i32, i32) {
    %c0_i32 = arith.constant 0 : i32
    %c0_i32_0 = arith.constant 0 : i32
    %c0_i32_1 = arith.constant 0 : i32
    return %c0_i32, %c0_i32_0 : i32, i32
  }
  func.func @transform_5(%arg0: i32) -> (i32, i32) {
    %c0_i32 = arith.constant 0 : i32
    %c0_i32_0 = arith.constant 0 : i32
    %c0_i32_1 = arith.constant 0 : i32
    return %c0_i32, %c0_i32_0 : i32, i32
  }
  func.func @transform_6(%arg0: i32) -> (i32, i32) {
    %c0_i32 = arith.constant 0 : i32
    %c0_i32_0 = arith.constant 0 : i32
    %c0_i32_1 = arith.constant 0 : i32
    return %c0_i32, %c0_i32_0 : i32, i32
  }
  func.func @transform_7(%arg0: i32) -> (i32, i32) {
    %c0_i32 = arith.constant 0 : i32
    %c0_i32_0 = arith.constant 0 : i32
    %c0_i32_1 = arith.constant 0 : i32
    return %c0_i32, %c0_i32_0 : i32, i32
  }
  func.func @transform_8(%arg0: i32) -> (i32, i32) {
    %c0_i32 = arith.constant 0 : i32
    %c0_i32_0 = arith.constant 0 : i32
    %c0_i32_1 = arith.constant 0 : i32
    return %c0_i32, %c0_i32_0 : i32, i32
  }
  func.func @transform_9(%arg0: i32) -> (i32, i32) {
    %c0_i32 = arith.constant 0 : i32
    %c0_i32_0 = arith.constant 0 : i32
    %c0_i32_1 = arith.constant 0 : i32
    return %c0_i32, %c0_i32_0 : i32, i32
  }
  func.func @transform_10(%arg0: i32) -> (i32, i32) {
    %c0_i32 = arith.constant 0 : i32
    %c0_i32_0 = arith.constant 0 : i32
    %c0_i32_1 = arith.constant 0 : i32
    return %c0_i32, %c0_i32_0 : i32, i32
  }
  func.func @transform_11(%arg0: i32) -> (i32, i32) {
    %c0_i32 = arith.constant 0 : i32
    %c0_i32_0 = arith.constant 0 : i32
    %c0_i32_1 = arith.constant 0 : i32
    return %c0_i32, %c0_i32_0 : i32, i32
  }
  func.func @transform_12(%arg0: i32) -> (i32, i32) {
    %c0_i32 = arith.constant 0 : i32
    %c0_i32_0 = arith.constant 0 : i32
    %c0_i32_1 = arith.constant 0 : i32
    return %c0_i32, %c0_i32_0 : i32, i32
  }
  func.func @transform_13(%arg0: i32) -> (i32, i32) {
    %c0_i32 = arith.constant 0 : i32
    %c0_i32_0 = arith.constant 0 : i32
    %c0_i32_1 = arith.constant 0 : i32
    return %c0_i32, %c0_i32_0 : i32, i32
  }
  func.func @transform_14(%arg0: i32) -> (i32, i32) {
    %c0_i32 = arith.constant 0 : i32
    %c0_i32_0 = arith.constant 0 : i32
    return %arg0, %c0_i32 : i32, i32
  }
}

</mosaic_0001>

<llo_original>
// kernel: block_forward.1
$region0: #{block_forward.1}
  #allocation0 [shape = 'u32[]', space=smem, size = 0x4, offset = 0x4, fixed_abs, tag = 'smem constant byte address 0x4 - core index']
  #allocation1 [shape = 'u32[144,128]{1,0:T(1,128)}', space=vmem, size = 0x12000, scoped, tag = 'internal scratch']
  %s0 = inlined_call_operand.hbm [shape: f32[32,64], index: 0, kind: input, shape index: {}]
  %s1 = inlined_call_operand.vmem [shape: f32[32,32], index: 1, kind: input, shape index: {}]
  %s2 = inlined_call_operand.vmem [shape: f32[1,64], index: 2, kind: input, shape index: {}]
  %s3 = inlined_call_operand.vmem [shape: f32[1,64], index: 3, kind: input, shape index: {}]
  %s4 = inlined_call_operand.vmem [shape: f32[64,64], index: 4, kind: input, shape index: {}]
  %s5 = inlined_call_operand.vmem [shape: f32[64,64], index: 5, kind: input, shape index: {}]
  %s6 = inlined_call_operand.vmem [shape: f32[64,256], index: 6, kind: input, shape index: {}]
  %s7 = inlined_call_operand.vmem [shape: f32[1,64], index: 7, kind: input, shape index: {}]
  %s8 = inlined_call_operand.hbm [shape: f32[1,64], index: 8, kind: input, shape index: {}]
  %s9 = inlined_call_operand.hbm [shape: f32[1,64], index: 9, kind: input, shape index: {}]
  %s10 = inlined_call_operand.vmem [shape: f32[64,256], index: 10, kind: input, shape index: {}]
  %s11 = inlined_call_operand.vmem [shape: f32[1,256], index: 11, kind: input, shape index: {}]
  %s12 = inlined_call_operand.vmem [shape: f32[256,64], index: 12, kind: input, shape index: {}]
  %s13 = inlined_call_operand.vmem [shape: f32[1,64], index: 13, kind: input, shape index: {}]
  %s14 = inlined_call_operand.hbm [shape: f32[32,64], index: 14, kind: output, shape index: {}]
  %s15 = sld [smem:[#allocation0]]
  $region78: #{block_forward.1} parent=0
    _
  %s17 = ssub.s32 1, %s15
  %s18 = scalar_select 0, %s17, %s15
  $region1: #{block_forward.1} parent=0
    #allocation2 [shape = 'u8[16384]{0}', space=vmem, size = 0x4000, scoped, tag = 'input window, operand 0, single buffered']
    #allocation3 [shape = 's32[1]{0}', space=sflag, size = 0x4, scoped, tag = 'scoped memory for block_forward.1']
    #allocation4 [shape = 's32[1]{0}', space=sflag, size = 0x4, scoped, tag = 'scoped memory for block_forward.1']
    #allocation5 [shape = 'u8[512]{0}', space=vmem, size = 0x400, scoped, tag = 'input window, operand 8, single buffered']
    #allocation6 [shape = 's32[1]{0}', space=sflag, size = 0x4, scoped, tag = 'scoped memory for block_forward.1']
    #allocation7 [shape = 'u8[512]{0}', space=vmem, size = 0x400, scoped, tag = 'input window, operand 9, single buffered']
    #allocation8 [shape = 'u8[16384]{0}', space=vmem, size = 0x4000, scoped, tag = 'output window, operand 0, single buffered']
    %19 = vsyncpa [#allocation3], 0
    %20 = vsyncpa [#allocation6], 0
    %21 = vsyncpa [#allocation4], 0
    // Predicated region
    $region2: #{block_forward.1} parent=1 // pred_check
      _
    $region3: #{block_forward.1} parent=1 // pred_check_branch
      %23 = sbr.rel (0) target = $region5
    $region4: #{block_forward.1} parent=1 // pred_region
      %s25 = ssub.s32 512, 512
      %26 = vsyncadd [#allocation3], %s25
      %s27 = sshll.u32 [#allocation2], 4
      %s28 = int_to_ptr.vmem [resolvable:$true] %s27
      %33 = dma.hbm_to_vmem [thread:$0]  %s0, 512, %s28, [#allocation3], 128, 128, 8
    $region5: #{block_forward.1} parent=1 // pred_fallthru
      _
    // Predicated region
    $region6: #{block_forward.1} parent=1 // pred_check
      _
    $region7: #{block_forward.1} parent=1 // pred_check_branch
      %35 = sbr.rel (0) target = $region9
    $region8: #{block_forward.1} parent=1 // pred_region
      _
    $region9: #{block_forward.1} parent=1 // pred_fallthru
      _
    // Predicated region
    $region10: #{block_forward.1} parent=1 // pred_check
      _
    $region11: #{block_forward.1} parent=1 // pred_check_branch
      %37 = sbr.rel (0) target = $region13
    $region12: #{block_forward.1} parent=1 // pred_region
      _
    $region13: #{block_forward.1} parent=1 // pred_fallthru
      _
    // Predicated region
    $region14: #{block_forward.1} parent=1 // pred_check
      _
    $region15: #{block_forward.1} parent=1 // pred_check_branch
      %39 = sbr.rel (0) target = $region17
    $region16: #{block_forward.1} parent=1 // pred_region
      _
    $region17: #{block_forward.1} parent=1 // pred_fallthru
      _
    // Predicated region
    $region18: #{block_forward.1} parent=1 // pred_check
      _
    $region19: #{block_forward.1} parent=1 // pred_check_branch
      %41 = sbr.rel (0) target = $region21
    $region20: #{block_forward.1} parent=1 // pred_region
      _
    $region21: #{block_forward.1} parent=1 // pred_fallthru
      _
    // Predicated region
    $region22: #{block_forward.1} parent=1 // pred_check
      _
    $region23: #{block_forward.1} parent=1 // pred_check_branch
      %43 = sbr.rel (0) target = $region25
    $region24: #{block_forward.1} parent=1 // pred_region
      _
    $region25: #{block_forward.1} parent=1 // pred_fallthru
      _
    // Predicated region
    $region26: #{block_forward.1} parent=1 // pred_check
      _
    $region27: #{block_forward.1} parent=1 // pred_check_branch
      %45 = sbr.rel (0) target = $region29
    $region28: #{block_forward.1} parent=1 // pred_region
      _
    $region29: #{block_forward.1} parent=1 // pred_fallthru
      _
    // Predicated region
    $region30: #{block_forward.1} parent=1 // pred_check
      _
    $region31: #{block_forward.1} parent=1 // pred_check_branch
      %47 = sbr.rel (0) target = $region33
    $region32: #{block_forward.1} parent=1 // pred_region
      _
    $region33: #{block_forward.1} parent=1 // pred_fallthru
      _
    // Predicated region
    $region34: #{block_forward.1} parent=1 // pred_check
      _
    $region35: #{block_forward.1} parent=1 // pred_check_branch
      %49 = sbr.rel (0) target = $region37
    $region36: #{block_forward.1} parent=1 // pred_region
      %s51 = ssub.s32 16, 16
      %52 = vsyncadd [#allocation6], %s51
      %s54 = sshll.u32 [#allocation5], 4
      %s55 = int_to_ptr.vmem [resolvable:$true] %s54
      %57 = dma.hbm_to_vmem [thread:$0]  %s8, 16, %s55, [#allocation6]
    $region37: #{block_forward.1} parent=1 // pred_fallthru
      _
    // Predicated region
    $region38: #{block_forward.1} parent=1 // pred_check
      _
    $region39: #{block_forward.1} parent=1 // pred_check_branch
      %59 = sbr.rel (0) target = $region41
    $region40: #{block_forward.1} parent=1 // pred_region
      %s61 = ssub.s32 16, 16
      %62 = vsyncadd [#allocation6], %s61
      %s64 = sshll.u32 [#allocation7], 4
      %s65 = int_to_ptr.vmem [resolvable:$true] %s64
      %67 = dma.hbm_to_vmem [thread:$0]  %s9, 16, %s65, [#allocation6]
    $region41: #{block_forward.1} parent=1 // pred_fallthru
      _
    // Predicated region
    $region42: #{block_forward.1} parent=1 // pred_check
      _
    $region43: #{block_forward.1} parent=1 // pred_check_branch
      %69 = sbr.rel (0) target = $region45
    $region44: #{block_forward.1} parent=1 // pred_region
      _
    $region45: #{block_forward.1} parent=1 // pred_fallthru
      _
    // Predicated region
    $region46: #{block_forward.1} parent=1 // pred_check
      _
    $region47: #{block_forward.1} parent=1 // pred_check_branch
      %71 = sbr.rel (0) target = $region49
    $region48: #{block_forward.1} parent=1 // pred_region
      _
    $region49: #{block_forward.1} parent=1 // pred_fallthru
      _
    // Predicated region
    $region50: #{block_forward.1} parent=1 // pred_check
      _
    $region51: #{block_forward.1} parent=1 // pred_check_branch
      %73 = sbr.rel (0) target = $region53
    $region52: #{block_forward.1} parent=1 // pred_region
      _
    $region53: #{block_forward.1} parent=1 // pred_fallthru
      _
    // Predicated region
    $region54: #{block_forward.1} parent=1 // pred_check
      _
    $region55: #{block_forward.1} parent=1 // pred_check_branch
      %75 = sbr.rel (0) target = $region57
    $region56: #{block_forward.1} parent=1 // pred_region
      _
    $region57: #{block_forward.1} parent=1 // pred_fallthru
      _
    // Predicated region
    $region58: #{block_forward.1} parent=1 // pred_check
      _
    $region59: #{block_forward.1} parent=1 // pred_check_branch
      %77 = sbr.rel (0) target = $region61
    $region60: #{block_forward.1} parent=1 // pred_region
      %78 = dma.done [#allocation3], 512
    $region61: #{block_forward.1} parent=1 // pred_fallthru
      _
    // Predicated region
    $region62: #{block_forward.1} parent=1 // pred_check
      _
    $region63: #{block_forward.1} parent=1 // pred_check_branch
      %80 = sbr.rel (0) target = $region65
    $region64: #{block_forward.1} parent=1 // pred_region
      %81 = dma.done [#allocation6], 16
    $region65: #{block_forward.1} parent=1 // pred_fallthru
      _
    // Predicated region
    $region66: #{block_forward.1} parent=1 // pred_check
      _
    $region67: #{block_forward.1} parent=1 // pred_check_branch
      %83 = sbr.rel (0) target = $region69
    $region68: #{block_forward.1} parent=1 // pred_region
      %84 = dma.done [#allocation6], 16
    $region69: #{block_forward.1} parent=1 // pred_fallthru
      _
    %v85 = vld [vmem:[#allocation2] sm:$0xff]
    %v86 = vld [vmem:[#allocation2 + $0x8] sm:$0xff]
    %v87 = vld [vmem:[#allocation2 + $0x10] sm:$0xff]
    %v88 = vld [vmem:[#allocation2 + $0x18] sm:$0xff]
    %v89 = vld [vmem:[%s1] sm:$0xff]
    %v90 = vld [vmem:[%s1 + $0x8] sm:$0xff]
    %v91 = vld [vmem:[%s1 + $0x10] sm:$0xff]
    %v92 = vld [vmem:[%s1 + $0x18] sm:$0xff]
    %vm93 = vcmask 523264
    %v94 = vsel %vm93, %v85, 0.0
    %95 = vadd.xlane.f32.xlu0 %v94
    %v96 = vpop.xlane.xlu0 %95
    %v97 = vsel %vm93, %v86, 0.0
    %98 = vadd.xlane.f32.xlu0 %v97
    %v99 = vpop.xlane.xlu0 %98
    %v100 = vsel %vm93, %v87, 0.0
    %101 = vadd.xlane.f32.xlu0 %v100
    %v102 = vpop.xlane.xlu0 %101
    %v103 = vsel %vm93, %v88, 0.0
    %104 = vadd.xlane.f32.xlu0 %v103
    %v105 = vpop.xlane.xlu0 %104
    %v106 = vrcp.pop 64.0
    %v107 = vmul.f32 %v96, %v106
    %v108 = vmul.f32 %v99, %v106
    %v109 = vmul.f32 %v102, %v106
    %v110 = vmul.f32 %v105, %v106
    %v111 = vsub.f32 %v85, %v107
    %v112 = vsub.f32 %v86, %v108
    %v113 = vsub.f32 %v87, %v109
    %v114 = vsub.f32 %v88, %v110
    %v115 = vmul.f32 %v111, %v111
    %v116 = vmul.f32 %v112, %v112
    %v117 = vmul.f32 %v113, %v113
    %v118 = vmul.f32 %v114, %v114
    %v119 = vsel %vm93, %v115, 0.0
    %120 = vadd.xlane.f32.xlu0 %v119
    %v121 = vpop.xlane.xlu0 %120
    %v122 = vsel %vm93, %v116, 0.0
    %123 = vadd.xlane.f32.xlu0 %v122
    %v124 = vpop.xlane.xlu0 %123
    %v125 = vsel %vm93, %v117, 0.0
    %126 = vadd.xlane.f32.xlu0 %v125
    %v127 = vpop.xlane.xlu0 %126
    %v128 = vsel %vm93, %v118, 0.0
    %129 = vadd.xlane.f32.xlu0 %v128
    %v130 = vpop.xlane.xlu0 %129
    %v131 = vmul.f32 %v121, %v106
    %v132 = vmul.f32 %v124, %v106
    %v133 = vmul.f32 %v127, %v106
    %v134 = vmul.f32 %v130, %v106
    %v135 = vadd.f32 %v131, 1e-05
    %v136 = vadd.f32 %v132, 1e-05
    %v137 = vadd.f32 %v133, 1e-05
    %v138 = vadd.f32 %v134, 1e-05
    %v139 = vrsqrt.pop %v135
    %v140 = vrsqrt.pop %v136
    %v141 = vrsqrt.pop %v137
    %v142 = vrsqrt.pop %v138
    %v143 = vmul.f32 %v111, %v139
    %v144 = vmul.f32 %v112, %v140
    %v145 = vmul.f32 %v113, %v141
    %v146 = vmul.f32 %v114, %v142
    %v147 = vld [vmem:[%s2] sm:$0x1]
    %v149 = vlaneseq
    %v150 = vshrl.u32 %v149, 7
    %v151 = vsub.s32 0, %v150
    %v152 = vrot.slane %v147, %v151
    %v154 = vmul.f32 %v143, %v152
    %v155 = vmul.f32 %v144, %v152
    %v156 = vmul.f32 %v145, %v152
    %v157 = vmul.f32 %v146, %v152
    %v158 = vld [vmem:[%s3] sm:$0x1]
    %v160 = vlaneseq
    %v161 = vshrl.u32 %v160, 7
    %v162 = vsub.s32 0, %v161
    %v163 = vrot.slane %v158, %v162
    %v165 = vadd.f32 %v154, %v163
    %v166 = vadd.f32 %v155, %v163
    %v167 = vadd.f32 %v156, %v163
    %v168 = vadd.f32 %v157, %v163
    %v169 = vld [vmem:[%s4] sm:$0xff]
    %v170 = vld [vmem:[%s4 + $0x8] sm:$0xff]
    %v171 = vld [vmem:[%s4 + $0x10] sm:$0xff]
    %v172 = vld [vmem:[%s4 + $0x18] sm:$0xff]
    %v173 = vld [vmem:[%s4 + $0x20] sm:$0xff]
    %v174 = vld [vmem:[%s4 + $0x28] sm:$0xff]
    %v175 = vld [vmem:[%s4 + $0x30] sm:$0xff]
    %v176 = vld [vmem:[%s4 + $0x38] sm:$0xff]
    %v178 = vsel %vm93, %v165, 0
    %v181 = vsel %vm93, %v166, 0
    %v184 = vsel %vm93, %v167, 0
    %v187 = vsel %vm93, %v168, 0
    %189 = vmatprep.subr.mxu0 0.0
    %190 = vmatpush1.msra.mxu0 %v169
    %191 = vmatprep.subr.mxu0 0.0
    %192 = vmatpush1.msra.mxu0 %v170
    %193 = vmatprep.subr.mxu0 0.0
    %194 = vmatpush1.msra.mxu0 %v171
    %195 = vmatprep.subr.mxu0 0.0
    %196 = vmatpush1.msra.mxu0 %v172
    %197 = vmatprep.subr.mxu0 0.0
    %198 = vmatpush1.msra.mxu0 %v173
    %199 = vmatprep.subr.mxu0 0.0
    %200 = vmatpush1.msra.mxu0 %v174
    %201 = vmatprep.subr.mxu0 0.0
    %202 = vmatpush1.msra.mxu0 %v175
    %203 = vmatprep.subr.mxu0 0.0
    %204 = vmatpush1.msra.mxu0 %v176
    %205 = vmatprep.subr.mxu0 0.0
    %206 = vmatpush1.msra.mxu0 0.0
    %207 = vmatprep.subr.mxu0 0.0
    %208 = vmatpush1.msra.mxu0 0.0
    %209 = vmatprep.subr.mxu0 0.0
    %210 = vmatpush1.msra.mxu0 0.0
    %211 = vmatprep.subr.mxu0 0.0
    %212 = vmatpush1.msra.mxu0 0.0
    %213 = vmatprep.subr.mxu0 0.0
    %214 = vmatpush1.msra.mxu0 0.0
    %215 = vmatprep.subr.mxu0 0.0
    %216 = vmatpush1.msra.mxu0 0.0
    %217 = vmatprep.subr.mxu0 0.0
    %218 = vmatpush1.msra.mxu0 0.0
    %219 = vmatprep.subr.mxu0 0.0
    %220 = vmatpush1.msra.mxu0 0.0
    %221 = vmatprep.subr.mxu0 0.0
    %222 = vmatpush1.msra.mxu0 0.0
    %223 = vmatprep.subr.mxu0 0.0
    %224 = vmatpush1.msra.mxu0 0.0
    %225 = vmatprep.subr.mxu0 0.0
    %226 = vmatpush1.msra.mxu0 0.0
    %227 = vmatprep.subr.mxu0 0.0
    %228 = vmatpush1.msra.mxu0 0.0
    %229 = vmatprep.subr.mxu0 0.0
    %230 = vmatpush1.msra.mxu0 0.0
    %231 = vmatprep.subr.mxu0 0.0
    %232 = vmatpush1.msra.mxu0 0.0
    %233 = vmatprep.subr.mxu0 0.0
    %234 = vmatpush1.msra.mxu0 0.0
    %235 = vmatprep.subr.mxu0 0.0
    %236 = vmatpush1.msra.mxu0 0.0
    %237 = vmatprep.subr.mxu0 0.0
    %238 = vmatpush1.msra.mxu0 0.0
    %239 = vmatprep.subr.mxu0 0.0
    %240 = vmatpush1.msra.mxu0 0.0
    %241 = vmatprep.subr.mxu0 0.0
    %242 = vmatpush1.msra.mxu0 0.0
    %243 = vmatprep.subr.mxu0 0.0
    %244 = vmatpush1.msra.mxu0 0.0
    %245 = vmatprep.subr.mxu0 0.0
    %246 = vmatpush1.msra.mxu0 0.0
    %247 = vmatprep.subr.mxu0 0.0
    %248 = vmatpush1.msra.mxu0 0.0
    %249 = vmatprep.subr.mxu0 0.0
    %250 = vmatpush1.msra.mxu0 0.0
    %251 = vmatprep.subr.mxu0 0.0
    %252 = vmatpush1.msra.mxu0 0.0
    %253 = vmatprep.mubr.f32.mxu0 0.0
    %254 = vmatmul.mubr.f32.gmra.mrb[0].mxu0 %v178
    %v255 = vpop.f32.mrb[0].mxu0
    %v256 = vadd.f32 0.0, %v255
    %v257 = vpop.f32.mrb[0].mxu0
    %258 = vmatprep.mubr.f32.mxu0 0.0
    %259 = vmatmul.mubr.f32.gmra.mrb[0].mxu0 %v181
    %v260 = vpop.f32.mrb[0].mxu0
    %v261 = vadd.f32 0.0, %v260
    %v262 = vpop.f32.mrb[0].mxu0
    %263 = vmatprep.mubr.f32.mxu0 0.0
    %264 = vmatmul.mubr.f32.gmra.mrb[0].mxu0 %v184
    %v265 = vpop.f32.mrb[0].mxu0
    %v266 = vadd.f32 0.0, %v265
    %v267 = vpop.f32.mrb[0].mxu0
    %268 = vmatprep.mubr.f32.mxu0 0.0
    %269 = vmatmul.mubr.f32.gmra.mrb[0].mxu0 %v187
    %v270 = vpop.f32.mrb[0].mxu0
    %v271 = vadd.f32 0.0, %v270
    %v272 = vpop.f32.mrb[0].mxu0
    %273 = vdwg.mxu0
    %v274 = vld [vmem:[%s5] sm:$0xff]
    %v275 = vld [vmem:[%s5 + $0x8] sm:$0xff]
    %v276 = vld [vmem:[%s5 + $0x10] sm:$0xff]
    %v277 = vld [vmem:[%s5 + $0x18] sm:$0xff]
    %v278 = vld [vmem:[%s5 + $0x20] sm:$0xff]
    %v279 = vld [vmem:[%s5 + $0x28] sm:$0xff]
    %v280 = vld [vmem:[%s5 + $0x30] sm:$0xff]
    %v281 = vld [vmem:[%s5 + $0x38] sm:$0xff]
    %282 = vmatprep.subr.mxu0 0.0
    %283 = vmatpush1.msra.mxu0 %v274
    %284 = vmatprep.subr.mxu0 0.0
    %285 = vmatpush1.msra.mxu0 %v275
    %286 = vmatprep.subr.mxu0 0.0
    %287 = vmatpush1.msra.mxu0 %v276
    %288 = vmatprep.subr.mxu0 0.0
    %289 = vmatpush1.msra.mxu0 %v277
    %290 = vmatprep.subr.mxu0 0.0
    %291 = vmatpush1.msra.mxu0 %v278
    %292 = vmatprep.subr.mxu0 0.0
    %293 = vmatpush1.msra.mxu0 %v279
    %294 = vmatprep.subr.mxu0 0.0
    %295 = vmatpush1.msra.mxu0 %v280
    %296 = vmatprep.subr.mxu0 0.0
    %297 = vmatpush1.msra.mxu0 %v281
    %298 = vmatprep.subr.mxu0 0.0
    %299 = vmatpush1.msra.mxu0 0.0
    %300 = vmatprep.subr.mxu0 0.0
    %301 = vmatpush1.msra.mxu0 0.0
    %302 = vmatprep.subr.mxu0 0.0
    %303 = vmatpush1.msra.mxu0 0.0
    %304 = vmatprep.subr.mxu0 0.0
    %305 = vmatpush1.msra.mxu0 0.0
    %306 = vmatprep.subr.mxu0 0.0
    %307 = vmatpush1.msra.mxu0 0.0
    %308 = vmatprep.subr.mxu0 0.0
    %309 = vmatpush1.msra.mxu0 0.0
    %310 = vmatprep.subr.mxu0 0.0
    %311 = vmatpush1.msra.mxu0 0.0
    %312 = vmatprep.subr.mxu0 0.0
    %313 = vmatpush1.msra.mxu0 0.0
    %314 = vmatprep.subr.mxu0 0.0
    %315 = vmatpush1.msra.mxu0 0.0
    %316 = vmatprep.subr.mxu0 0.0
    %317 = vmatpush1.msra.mxu0 0.0
    %318 = vmatprep.subr.mxu0 0.0
    %319 = vmatpush1.msra.mxu0 0.0
    %320 = vmatprep.subr.mxu0 0.0
    %321 = vmatpush1.msra.mxu0 0.0
    %322 = vmatprep.subr.mxu0 0.0
    %323 = vmatpush1.msra.mxu0 0.0
    %324 = vmatprep.subr.mxu0 0.0
    %325 = vmatpush1.msra.mxu0 0.0
    %326 = vmatprep.subr.mxu0 0.0
    %327 = vmatpush1.msra.mxu0 0.0
    %328 = vmatprep.subr.mxu0 0.0
    %329 = vmatpush1.msra.mxu0 0.0
    %330 = vmatprep.subr.mxu0 0.0
    %331 = vmatpush1.msra.mxu0 0.0
    %332 = vmatprep.subr.mxu0 0.0
    %333 = vmatpush1.msra.mxu0 0.0
    %334 = vmatprep.subr.mxu0 0.0
    %335 = vmatpush1.msra.mxu0 0.0
    %336 = vmatprep.subr.mxu0 0.0
    %337 = vmatpush1.msra.mxu0 0.0
    %338 = vmatprep.subr.mxu0 0.0
    %339 = vmatpush1.msra.mxu0 0.0
    %340 = vmatprep.subr.mxu0 0.0
    %341 = vmatpush1.msra.mxu0 0.0
    %342 = vmatprep.subr.mxu0 0.0
    %343 = vmatpush1.msra.mxu0 0.0
    %344 = vmatprep.subr.mxu0 0.0
    %345 = vmatpush1.msra.mxu0 0.0
    %346 = vmatprep.mubr.f32.mxu0 0.0
    %347 = vmatmul.mubr.f32.gmra.mrb[0].mxu0 %v178
    %v348 = vpop.f32.mrb[0].mxu0
    %v349 = vadd.f32 0.0, %v348
    %v350 = vpop.f32.mrb[0].mxu0
    %351 = vmatprep.mubr.f32.mxu0 0.0
    %352 = vmatmul.mubr.f32.gmra.mrb[0].mxu0 %v181
    %v353 = vpop.f32.mrb[0].mxu0
    %v354 = vadd.f32 0.0, %v353
    %v355 = vpop.f32.mrb[0].mxu0
    %356 = vmatprep.mubr.f32.mxu0 0.0
    %357 = vmatmul.mubr.f32.gmra.mrb[0].mxu0 %v184
    %v358 = vpop.f32.mrb[0].mxu0
    %v359 = vadd.f32 0.0, %v358
    %v360 = vpop.f32.mrb[0].mxu0
    %361 = vmatprep.mubr.f32.mxu0 0.0
    %362 = vmatmul.mubr.f32.gmra.mrb[0].mxu0 %v187
    %v363 = vpop.f32.mrb[0].mxu0
    %v364 = vadd.f32 0.0, %v363
    %v365 = vpop.f32.mrb[0].mxu0
    %366 = vdwg.mxu0
    %v367 = vld [vmem:[%s6] sm:$0xff]
    %v368 = vld [vmem:[%s6 + $0x8] sm:$0xff]
    %v369 = vld [vmem:[%s6 + $0x10] sm:$0xff]
    %v370 = vld [vmem:[%s6 + $0x18] sm:$0xff]
    %v371 = vld [vmem:[%s6 + $0x20] sm:$0xff]
    %v372 = vld [vmem:[%s6 + $0x28] sm:$0xff]
    %v373 = vld [vmem:[%s6 + $0x30] sm:$0xff]
    %v374 = vld [vmem:[%s6 + $0x38] sm:$0xff]
    %v375 = vld [vmem:[%s6 + $0x40] sm:$0xff]
    %v376 = vld [vmem:[%s6 + $0x48] sm:$0xff]
    %v377 = vld [vmem:[%s6 + $0x50] sm:$0xff]
    %v378 = vld [vmem:[%s6 + $0x58] sm:$0xff]
    %v379 = vld [vmem:[%s6 + $0x60] sm:$0xff]
    %v380 = vld [vmem:[%s6 + $0x68] sm:$0xff]
    %v381 = vld [vmem:[%s6 + $0x70] sm:$0xff]
    %v382 = vld [vmem:[%s6 + $0x78] sm:$0xff]
    %383 = vmatprep.subr.mxu0 %v368
    %384 = vmatpush1.msra.mxu0 %v367
    %385 = vmatprep.subr.mxu0 %v370
    %386 = vmatpush1.msra.mxu0 %v369
    %387 = vmatprep.subr.mxu0 %v372
    %388 = vmatpush1.msra.mxu0 %v371
    %389 = vmatprep.subr.mxu0 %v374
    %390 = vmatpush1.msra.mxu0 %v373
    %391 = vmatprep.subr.mxu0 %v376
    %392 = vmatpush1.msra.mxu0 %v375
    %393 = vmatprep.subr.mxu0 %v378
    %394 = vmatpush1.msra.mxu0 %v377
    %395 = vmatprep.subr.mxu0 %v380
    %396 = vmatpush1.msra.mxu0 %v379
    %397 = vmatprep.subr.mxu0 %v382
    %398 = vmatpush1.msra.mxu0 %v381
    %399 = vmatprep.subr.mxu0 0.0
    %400 = vmatpush1.msra.mxu0 0.0
    %401 = vmatprep.subr.mxu0 0.0
    %402 = vmatpush1.msra.mxu0 0.0
    %403 = vmatprep.subr.mxu0 0.0
    %404 = vmatpush1.msra.mxu0 0.0
    %405 = vmatprep.subr.mxu0 0.0
    %406 = vmatpush1.msra.mxu0 0.0
    %407 = vmatprep.subr.mxu0 0.0
    %408 = vmatpush1.msra.mxu0 0.0
    %409 = vmatprep.subr.mxu0 0.0
    %410 = vmatpush1.msra.mxu0 0.0
    %411 = vmatprep.subr.mxu0 0.0
    %412 = vmatpush1.msra.mxu0 0.0
    %413 = vmatprep.subr.mxu0 0.0
    %414 = vmatpush1.msra.mxu0 0.0
    %415 = vmatprep.subr.mxu0 0.0
    %416 = vmatpush1.msra.mxu0 0.0
    %417 = vmatprep.subr.mxu0 0.0
    %418 = vmatpush1.msra.mxu0 0.0
    %419 = vmatprep.subr.mxu0 0.0
    %420 = vmatpush1.msra.mxu0 0.0
    %421 = vmatprep.subr.mxu0 0.0
    %422 = vmatpush1.msra.mxu0 0.0
    %423 = vmatprep.subr.mxu0 0.0
    %424 = vmatpush1.msra.mxu0 0.0
    %425 = vmatprep.subr.mxu0 0.0
    %426 = vmatpush1.msra.mxu0 0.0
    %427 = vmatprep.subr.mxu0 0.0
    %428 = vmatpush1.msra.mxu0 0.0
    %429 = vmatprep.subr.mxu0 0.0
    %430 = vmatpush1.msra.mxu0 0.0
    %431 = vmatprep.subr.mxu0 0.0
    %432 = vmatpush1.msra.mxu0 0.0
    %433 = vmatprep.subr.mxu0 0.0
    %434 = vmatpush1.msra.mxu0 0.0
    %435 = vmatprep.subr.mxu0 0.0
    %436 = vmatpush1.msra.mxu0 0.0
    %437 = vmatprep.subr.mxu0 0.0
    %438 = vmatpush1.msra.mxu0 0.0
    %439 = vmatprep.subr.mxu0 0.0
    %440 = vmatpush1.msra.mxu0 0.0
    %441 = vmatprep.subr.mxu0 0.0
    %442 = vmatpush1.msra.mxu0 0.0
    %443 = vmatprep.subr.mxu0 0.0
    %444 = vmatpush1.msra.mxu0 0.0
    %445 = vmatprep.subr.mxu0 0.0
    %446 = vmatpush1.msra.mxu0 0.0
    %447 = vmatprep.mubr.f32.mxu0 0.0
    %448 = vmatmul.mubr.f32.gmra.mrb[0].mxu0 %v178
    %v449 = vpop.f32.mrb[0].mxu0
    %v450 = vadd.f32 0.0, %v449
    %v451 = vpop.f32.mrb[0].mxu0
    %v452 = vadd.f32 0.0, %v451
    %453 = vmatprep.mubr.f32.mxu0 0.0
    %454 = vmatmul.mubr.f32.gmra.mrb[0].mxu0 %v181
    %v455 = vpop.f32.mrb[0].mxu0
    %v456 = vadd.f32 0.0, %v455
    %v457 = vpop.f32.mrb[0].mxu0
    %v458 = vadd.f32 0.0, %v457
    %459 = vmatprep.mubr.f32.mxu0 0.0
    %460 = vmatmul.mubr.f32.gmra.mrb[0].mxu0 %v184
    %v461 = vpop.f32.mrb[0].mxu0
    %v462 = vadd.f32 0.0, %v461
    %v463 = vpop.f32.mrb[0].mxu0
    %v464 = vadd.f32 0.0, %v463
    %465 = vmatprep.mubr.f32.mxu0 0.0
    %466 = vmatmul.mubr.f32.gmra.mrb[0].mxu0 %v187
    %v467 = vpop.f32.mrb[0].mxu0
    %v468 = vadd.f32 0.0, %v467
    %v469 = vpop.f32.mrb[0].mxu0
    %v470 = vadd.f32 0.0, %v469
    %471 = vdwg.mxu0
    %vm472 = vcmask 130048
    %v474 = vsel %vm472, %v256, 0
    %v477 = vsel %vm472, %v261, 0
    %v480 = vsel %vm472, %v266, 0
    %v483 = vsel %vm472, %v271, 0
    %v486 = vsel %vm472, %v349, 0
    %v489 = vsel %vm472, %v354, 0
    %v492 = vsel %vm472, %v359, 0
    %v495 = vsel %vm472, %v364, 0
    %497 = vmatprep.subr.mxu0 0.0
    %498 = vmatpush1.xpose.msra.mxu0 %v486
    %499 = vmatprep.subr.mxu0 0.0
    %500 = vmatpush1.xpose.msra.mxu0 %v489
    %501 = vmatprep.subr.mxu0 0.0
    %502 = vmatpush1.xpose.msra.mxu0 %v492
    %503 = vmatprep.subr.mxu0 0.0
    %504 = vmatpush1.xpose.msra.mxu0 %v495
    %505 = vmatprep.subr.mxu0 0.0
    %506 = vmatpush1.xpose.msra.mxu0 0.0
    %507 = vmatprep.subr.mxu0 0.0
    %508 = vmatpush1.xpose.msra.mxu0 0.0
    %509 = vmatprep.subr.mxu0 0.0
    %510 = vmatpush1.xpose.msra.mxu0 0.0
    %511 = vmatprep.subr.mxu0 0.0
    %512 = vmatpush1.xpose.msra.mxu0 0.0
    %513 = vmatprep.subr.mxu0 0.0
    %514 = vmatpush1.xpose.msra.mxu0 0.0
    %515 = vmatprep.subr.mxu0 0.0
    %516 = vmatpush1.xpose.msra.mxu0 0.0
    %517 = vmatprep.subr.mxu0 0.0
    %518 = vmatpush1.xpose.msra.mxu0 0.0
    %519 = vmatprep.subr.mxu0 0.0
    %520 = vmatpush1.xpose.msra.mxu0 0.0
    %521 = vmatprep.subr.mxu0 0.0
    %522 = vmatpush1.xpose.msra.mxu0 0.0
    %523 = vmatprep.subr.mxu0 0.0
    %524 = vmatpush1.xpose.msra.mxu0 0.0
    %525 = vmatprep.subr.mxu0 0.0
    %526 = vmatpush1.xpose.msra.mxu0 0.0
    %527 = vmatprep.subr.mxu0 0.0
    %528 = vmatpush1.xpose.msra.mxu0 0.0
    %529 = vmatprep.subr.mxu0 0.0
    %530 = vmatpush1.xpose.msra.mxu0 0.0
    %531 = vmatprep.subr.mxu0 0.0
    %532 = vmatpush1.xpose.msra.mxu0 0.0
    %533 = vmatprep.subr.mxu0 0.0
    %534 = vmatpush1.xpose.msra.mxu0 0.0
    %535 = vmatprep.subr.mxu0 0.0
    %536 = vmatpush1.xpose.msra.mxu0 0.0
    %537 = vmatprep.subr.mxu0 0.0
    %538 = vmatpush1.xpose.msra.mxu0 0.0
    %539 = vmatprep.subr.mxu0 0.0
    %540 = vmatpush1.xpose.msra.mxu0 0.0
    %541 = vmatprep.subr.mxu0 0.0
    %542 = vmatpush1.xpose.msra.mxu0 0.0
    %543 = vmatprep.subr.mxu0 0.0
    %544 = vmatpush1.xpose.msra.mxu0 0.0
    %545 = vmatprep.subr.mxu0 0.0
    %546 = vmatpush1.xpose.msra.mxu0 0.0
    %547 = vmatprep.subr.mxu0 0.0
    %548 = vmatpush1.xpose.msra.mxu0 0.0
    %549 = vmatprep.subr.mxu0 0.0
    %550 = vmatpush1.xpose.msra.mxu0 0.0
    %551 = vmatprep.subr.mxu0 0.0
    %552 = vmatpush1.xpose.msra.mxu0 0.0
    %553 = vmatprep.subr.mxu0 0.0
    %554 = vmatpush1.xpose.msra.mxu0 0.0
    %555 = vmatprep.subr.mxu0 0.0
    %556 = vmatpush1.xpose.msra.mxu0 0.0
    %557 = vmatprep.subr.mxu0 0.0
    %558 = vmatpush1.xpose.msra.mxu0 0.0
    %559 = vmatprep.subr.mxu0 0.0
    %560 = vmatpush1.xpose.msra.mxu0 0.0
    %561 = vmatprep.mubr.f32.mxu0 0.0
    %562 = vmatmul.mubr.f32.gmra.mrb[0].mxu0 %v474
    %v563 = vpop.f32.mrb[0].mxu0
    %v564 = vadd.f32 %v89, %v563
    %v565 = vpop.f32.mrb[0].mxu0
    %566 = vmatprep.mubr.f32.mxu0 0.0
    %567 = vmatmul.mubr.f32.gmra.mrb[0].mxu0 %v477
    %v568 = vpop.f32.mrb[0].mxu0
    %v569 = vadd.f32 %v90, %v568
    %v570 = vpop.f32.mrb[0].mxu0
    %571 = vmatprep.mubr.f32.mxu0 0.0
    %572 = vmatmul.mubr.f32.gmra.mrb[0].mxu0 %v480
    %v573 = vpop.f32.mrb[0].mxu0
    %v574 = vadd.f32 %v91, %v573
    %v575 = vpop.f32.mrb[0].mxu0
    %576 = vmatprep.mubr.f32.mxu0 0.0
    %577 = vmatmul.mubr.f32.gmra.mrb[0].mxu0 %v483
    %v578 = vpop.f32.mrb[0].mxu0
    %v579 = vadd.f32 %v92, %v578
    %v580 = vpop.f32.mrb[0].mxu0
    %581 = vdwg.mxu0
    %vm582 = vcmask 261120
    %v583 = vsel %vm582, %v564, -inf
    %584 = vmax.xlane.f32.xlu0 %v583
    %v585 = vpop.xlane.xlu0 %584
    %v586 = vsel %vm582, %v569, -inf
    %587 = vmax.xlane.f32.xlu0 %v586
    %v588 = vpop.xlane.xlu0 %587
    %v589 = vsel %vm582, %v574, -inf
    %590 = vmax.xlane.f32.xlu0 %v589
    %v591 = vpop.xlane.xlu0 %590
    %v592 = vsel %vm582, %v579, -inf
    %593 = vmax.xlane.f32.xlu0 %v592
    %v594 = vpop.xlane.xlu0 %593
    %v595 = vsub.f32 %v564, %v585
    %v596 = vsub.f32 %v569, %v588
    %v597 = vsub.f32 %v574, %v591
    %v598 = vsub.f32 %v579, %v594
    %v599 = vmul.f32 %v595, 1.442695
    %v600 = vpow.pop %v599
    %v601 = vmul.f32 %v596, 1.442695
    %v602 = vpow.pop %v601
    %v603 = vmul.f32 %v597, 1.442695
    %v604 = vpow.pop %v603
    %v605 = vmul.f32 %v598, 1.442695
    %v606 = vpow.pop %v605
    %v607 = vsel %vm582, %v600, 0.0
    %608 = vadd.xlane.f32.xlu0 %v607
    %v609 = vpop.xlane.xlu0 %608
    %v610 = vsel %vm582, %v602, 0.0
    %611 = vadd.xlane.f32.xlu0 %v610
    %v612 = vpop.xlane.xlu0 %611
    %v613 = vsel %vm582, %v604, 0.0
    %614 = vadd.xlane.f32.xlu0 %v613
    %v615 = vpop.xlane.xlu0 %614
    %v616 = vsel %vm582, %v606, 0.0
    %617 = vadd.xlane.f32.xlu0 %v616
    %v618 = vpop.xlane.xlu0 %617
    %v619 = vrcp.pop %v609
    %v620 = vrcp.pop %v612
    %v621 = vrcp.pop %v615
    %v622 = vrcp.pop %v618
    %v623 = vmul.f32 %v609, %v619
    %v624 = vmul.f32 %v612, %v620
    %v625 = vmul.f32 %v615, %v621
    %v626 = vmul.f32 %v618, %v622
    %v627 = vsub.f32 2.0, %v623
    %v628 = vsub.f32 2.0, %v624
    %v629 = vsub.f32 2.0, %v625
    %v630 = vsub.f32 2.0, %v626
    %v631 = vmul.f32 %v619, %v627
    %v632 = vmul.f32 %v620, %v628
    %v633 = vmul.f32 %v621, %v629
    %v634 = vmul.f32 %v622, %v630
    %v635 = vmul.f32 %v600, %v631
    %v636 = vmul.f32 %v602, %v632
    %v637 = vmul.f32 %v604, %v633
    %v638 = vmul.f32 %v606, %v634
    %639 = vrot.lane.b32.xlu0 %v256, 112
    %v640 = vpop.permute.xlu0 %639
    %641 = vrot.lane.b32.xlu0 %v261, 112
    %v642 = vpop.permute.xlu0 %641
    %643 = vrot.lane.b32.xlu0 %v266, 112
    %v644 = vpop.permute.xlu0 %643
    %645 = vrot.lane.b32.xlu0 %v271, 112
    %v646 = vpop.permute.xlu0 %645
    %647 = vrot.lane.b32.xlu0 %v349, 112
    %v648 = vpop.permute.xlu0 %647
    %649 = vrot.lane.b32.xlu0 %v354, 112
    %v650 = vpop.permute.xlu0 %649
    %651 = vrot.lane.b32.xlu0 %v359, 112
    %v652 = vpop.permute.xlu0 %651
    %653 = vrot.lane.b32.xlu0 %v364, 112
    %v654 = vpop.permute.xlu0 %653
    %v655 = vsel %vm472, %v640, 0
    %v657 = vsel %vm472, %v642, 0
    %v659 = vsel %vm472, %v644, 0
    %v661 = vsel %vm472, %v646, 0
    %v663 = vsel %vm472, %v648, 0
    %v665 = vsel %vm472, %v650, 0
    %v667 = vsel %vm472, %v652, 0
    %v669 = vsel %vm472, %v654, 0
    %671 = vmatprep.subr.mxu0 0.0
    %672 = vmatpush1.xpose.msra.mxu0 %v663
    %673 = vmatprep.subr.mxu0 0.0
    %674 = vmatpush1.xpose.msra.mxu0 %v665
    %675 = vmatprep.subr.mxu0 0.0
    %676 = vmatpush1.xpose.msra.mxu0 %v667
    %677 = vmatprep.subr.mxu0 0.0
    %678 = vmatpush1.xpose.msra.mxu0 %v669
    %679 = vmatprep.subr.mxu0 0.0
    %680 = vmatpush1.xpose.msra.mxu0 0.0
    %681 = vmatprep.subr.mxu0 0.0
    %682 = vmatpush1.xpose.msra.mxu0 0.0
    %683 = vmatprep.subr.mxu0 0.0
    %684 = vmatpush1.xpose.msra.mxu0 0.0
    %685 = vmatprep.subr.mxu0 0.0
    %686 = vmatpush1.xpose.msra.mxu0 0.0
    %687 = vmatprep.subr.mxu0 0.0
    %688 = vmatpush1.xpose.msra.mxu0 0.0
    %689 = vmatprep.subr.mxu0 0.0
    %690 = vmatpush1.xpose.msra.mxu0 0.0
    %691 = vmatprep.subr.mxu0 0.0
    %692 = vmatpush1.xpose.msra.mxu0 0.0
    %693 = vmatprep.subr.mxu0 0.0
    %694 = vmatpush1.xpose.msra.mxu0 0.0
    %695 = vmatprep.subr.mxu0 0.0
    %696 = vmatpush1.xpose.msra.mxu0 0.0
    %697 = vmatprep.subr.mxu0 0.0
    %698 = vmatpush1.xpose.msra.mxu0 0.0
    %699 = vmatprep.subr.mxu0 0.0
    %700 = vmatpush1.xpose.msra.mxu0 0.0
    %701 = vmatprep.subr.mxu0 0.0
    %702 = vmatpush1.xpose.msra.mxu0 0.0
    %703 = vmatprep.subr.mxu0 0.0
    %704 = vmatpush1.xpose.msra.mxu0 0.0
    %705 = vmatprep.subr.mxu0 0.0
    %706 = vmatpush1.xpose.msra.mxu0 0.0
    %707 = vmatprep.subr.mxu0 0.0
    %708 = vmatpush1.xpose.msra.mxu0 0.0
    %709 = vmatprep.subr.mxu0 0.0
    %710 = vmatpush1.xpose.msra.mxu0 0.0
    %711 = vmatprep.subr.mxu0 0.0
    %712 = vmatpush1.xpose.msra.mxu0 0.0
    %713 = vmatprep.subr.mxu0 0.0
    %714 = vmatpush1.xpose.msra.mxu0 0.0
    %715 = vmatprep.subr.mxu0 0.0
    %716 = vmatpush1.xpose.msra.mxu0 0.0
    %717 = vmatprep.subr.mxu0 0.0
    %718 = vmatpush1.xpose.msra.mxu0 0.0
    %719 = vmatprep.subr.mxu0 0.0
    %720 = vmatpush1.xpose.msra.mxu0 0.0
    %721 = vmatprep.subr.mxu0 0.0
    %722 = vmatpush1.xpose.msra.mxu0 0.0
    %723 = vmatprep.subr.mxu0 0.0
    %724 = vmatpush1.xpose.msra.mxu0 0.0
    %725 = vmatprep.subr.mxu0 0.0
    %726 = vmatpush1.xpose.msra.mxu0 0.0
    %727 = vmatprep.subr.mxu0 0.0
    %728 = vmatpush1.xpose.msra.mxu0 0.0
    %729 = vmatprep.subr.mxu0 0.0
    %730 = vmatpush1.xpose.msra.mxu0 0.0
    %731 = vmatprep.subr.mxu0 0.0
    %732 = vmatpush1.xpose.msra.mxu0 0.0
    %733 = vmatprep.subr.mxu0 0.0
    %734 = vmatpush1.xpose.msra.mxu0 0.0
    %735 = vmatprep.mubr.f32.mxu0 0.0
    %736 = vmatmul.mubr.f32.gmra.mrb[0].mxu0 %v655
    %v737 = vpop.f32.mrb[0].mxu0
    %v738 = vadd.f32 %v89, %v737
    %v739 = vpop.f32.mrb[0].mxu0
    %740 = vmatprep.mubr.f32.mxu0 0.0
    %741 = vmatmul.mubr.f32.gmra.mrb[0].mxu0 %v657
    %v742 = vpop.f32.mrb[0].mxu0
    %v743 = vadd.f32 %v90, %v742
    %v744 = vpop.f32.mrb[0].mxu0
    %745 = vmatprep.mubr.f32.mxu0 0.0
    %746 = vmatmul.mubr.f32.gmra.mrb[0].mxu0 %v659
    %v747 = vpop.f32.mrb[0].mxu0
    %v748 = vadd.f32 %v91, %v747
    %v749 = vpop.f32.mrb[0].mxu0
    %750 = vmatprep.mubr.f32.mxu0 0.0
    %751 = vmatmul.mubr.f32.gmra.mrb[0].mxu0 %v661
    %v752 = vpop.f32.mrb[0].mxu0
    %v753 = vadd.f32 %v92, %v752
    %v754 = vpop.f32.mrb[0].mxu0
    %755 = vdwg.mxu0
    %v756 = vsel %vm582, %v738, -inf
    %757 = vmax.xlane.f32.xlu0 %v756
    %v758 = vpop.xlane.xlu0 %757
    %v759 = vsel %vm582, %v743, -inf
    %760 = vmax.xlane.f32.xlu0 %v759
    %v761 = vpop.xlane.xlu0 %760
    %v762 = vsel %vm582, %v748, -inf
    %763 = vmax.xlane.f32.xlu0 %v762
    %v764 = vpop.xlane.xlu0 %763
    %v765 = vsel %vm582, %v753, -inf
    %766 = vmax.xlane.f32.xlu0 %v765
    %v767 = vpop.xlane.xlu0 %766
    %v768 = vsub.f32 %v738, %v758
    %v769 = vsub.f32 %v743, %v761
    %v770 = vsub.f32 %v748, %v764
    %v771 = vsub.f32 %v753, %v767
    %v772 = vmul.f32 %v768, 1.442695
    %v773 = vpow.pop %v772
    %v774 = vmul.f32 %v769, 1.442695
    %v775 = vpow.pop %v774
    %v776 = vmul.f32 %v770, 1.442695
    %v777 = vpow.pop %v776
    %v778 = vmul.f32 %v771, 1.442695
    %v779 = vpow.pop %v778
    %v780 = vsel %vm582, %v773, 0.0
    %781 = vadd.xlane.f32.xlu0 %v780
    %v782 = vpop.xlane.xlu0 %781
    %v783 = vsel %vm582, %v775, 0.0
    %784 = vadd.xlane.f32.xlu0 %v783
    %v785 = vpop.xlane.xlu0 %784
    %v786 = vsel %vm582, %v777, 0.0
    %787 = vadd.xlane.f32.xlu0 %v786
    %v788 = vpop.xlane.xlu0 %787
    %v789 = vsel %vm582, %v779, 0.0
    %790 = vadd.xlane.f32.xlu0 %v789
    %v791 = vpop.xlane.xlu0 %790
    %v792 = vrcp.pop %v782
    %v793 = vrcp.pop %v785
    %v794 = vrcp.pop %v788
    %v795 = vrcp.pop %v791
    %v796 = vmul.f32 %v782, %v792
    %v797 = vmul.f32 %v785, %v793
    %v798 = vmul.f32 %v788, %v794
    %v799 = vmul.f32 %v791, %v795
    %v800 = vsub.f32 2.0, %v796
    %v801 = vsub.f32 2.0, %v797
    %v802 = vsub.f32 2.0, %v798
    %v803 = vsub.f32 2.0, %v799
    %v804 = vmul.f32 %v792, %v800
    %v805 = vmul.f32 %v793, %v801
    %v806 = vmul.f32 %v794, %v802
    %v807 = vmul.f32 %v795, %v803
    %v808 = vmul.f32 %v773, %v804
    %v809 = vmul.f32 %v775, %v805
    %v810 = vmul.f32 %v777, %v806
    %v811 = vmul.f32 %v779, %v807
    %816 = vrot.lane.b32.xlu0 %v450, 64
    %v817 = vpop.permute.xlu0 %816
    %818 = vrot.lane.b32.xlu0 %v456, 64
    %v819 = vpop.permute.xlu0 %818
    %820 = vrot.lane.b32.xlu0 %v462, 64
    %v821 = vpop.permute.xlu0 %820
    %822 = vrot.lane.b32.xlu0 %v468, 64
    %v823 = vpop.permute.xlu0 %822
    %v829 = vsel %vm582, %v808, 0
    %v832 = vsel %vm582, %v809, 0
    %v835 = vsel %vm582, %v810, 0
    %v838 = vsel %vm582, %v811, 0
    %840 = vmatprep.subr.mxu0 0.0
    %841 = vmatpush1.msra.mxu0 %v817
    %842 = vmatprep.subr.mxu0 0.0
    %843 = vmatpush1.msra.mxu0 %v819
    %844 = vmatprep.subr.mxu0 0.0
    %845 = vmatpush1.msra.mxu0 %v821
    %846 = vmatprep.subr.mxu0 0.0
    %847 = vmatpush1.msra.mxu0 %v823
    %848 = vmatprep.subr.mxu0 0.0
    %849 = vmatpush1.msra.mxu0 0.0
    %850 = vmatprep.subr.mxu0 0.0
    %851 = vmatpush1.msra.mxu0 0.0
    %852 = vmatprep.subr.mxu0 0.0
    %853 = vmatpush1.msra.mxu0 0.0
    %854 = vmatprep.subr.mxu0 0.0
    %855 = vmatpush1.msra.mxu0 0.0
    %856 = vmatprep.subr.mxu0 0.0
    %857 = vmatpush1.msra.mxu0 0.0
    %858 = vmatprep.subr.mxu0 0.0
    %859 = vmatpush1.msra.mxu0 0.0
    %860 = vmatprep.subr.mxu0 0.0
    %861 = vmatpush1.msra.mxu0 0.0
    %862 = vmatprep.subr.mxu0 0.0
    %863 = vmatpush1.msra.mxu0 0.0
    %864 = vmatprep.subr.mxu0 0.0
    %865 = vmatpush1.msra.mxu0 0.0
    %866 = vmatprep.subr.mxu0 0.0
    %867 = vmatpush1.msra.mxu0 0.0
    %868 = vmatprep.subr.mxu0 0.0
    %869 = vmatpush1.msra.mxu0 0.0
    %870 = vmatprep.subr.mxu0 0.0
    %871 = vmatpush1.msra.mxu0 0.0
    %872 = vmatprep.subr.mxu0 0.0
    %873 = vmatpush1.msra.mxu0 0.0
    %874 = vmatprep.subr.mxu0 0.0
    %875 = vmatpush1.msra.mxu0 0.0
    %876 = vmatprep.subr.mxu0 0.0
    %877 = vmatpush1.msra.mxu0 0.0
    %878 = vmatprep.subr.mxu0 0.0
    %879 = vmatpush1.msra.mxu0 0.0
    %880 = vmatprep.subr.mxu0 0.0
    %881 = vmatpush1.msra.mxu0 0.0
    %882 = vmatprep.subr.mxu0 0.0
    %883 = vmatpush1.msra.mxu0 0.0
    %884 = vmatprep.subr.mxu0 0.0
    %885 = vmatpush1.msra.mxu0 0.0
    %886 = vmatprep.subr.mxu0 0.0
    %887 = vmatpush1.msra.mxu0 0.0
    %888 = vmatprep.subr.mxu0 0.0
    %889 = vmatpush1.msra.mxu0 0.0
    %890 = vmatprep.subr.mxu0 0.0
    %891 = vmatpush1.msra.mxu0 0.0
    %892 = vmatprep.subr.mxu0 0.0
    %893 = vmatpush1.msra.mxu0 0.0
    %894 = vmatprep.subr.mxu0 0.0
    %895 = vmatpush1.msra.mxu0 0.0
    %896 = vmatprep.subr.mxu0 0.0
    %897 = vmatpush1.msra.mxu0 0.0
    %898 = vmatprep.subr.mxu0 0.0
    %899 = vmatpush1.msra.mxu0 0.0
    %900 = vmatprep.subr.mxu0 0.0
    %901 = vmatpush1.msra.mxu0 0.0
    %902 = vmatprep.subr.mxu0 0.0
    %903 = vmatpush1.msra.mxu0 0.0
    %904 = vmatprep.mubr.f32.mxu0 0.0
    %905 = vmatmul.mubr.f32.gmra.mrb[0].mxu0 %v829
    %v906 = vpop.f32.mrb[0].mxu0
    %v907 = vadd.f32 0.0, %v906
    %v908 = vpop.f32.mrb[0].mxu0
    %909 = vmatprep.mubr.f32.mxu0 0.0
    %910 = vmatmul.mubr.f32.gmra.mrb[0].mxu0 %v832
    %v911 = vpop.f32.mrb[0].mxu0
    %v912 = vadd.f32 0.0, %v911
    %v913 = vpop.f32.mrb[0].mxu0
    %914 = vmatprep.mubr.f32.mxu0 0.0
    %915 = vmatmul.mubr.f32.gmra.mrb[0].mxu0 %v835
    %v916 = vpop.f32.mrb[0].mxu0
    %v917 = vadd.f32 0.0, %v916
    %v918 = vpop.f32.mrb[0].mxu0
    %919 = vmatprep.mubr.f32.mxu0 0.0
    %920 = vmatmul.mubr.f32.gmra.mrb[0].mxu0 %v838
    %v921 = vpop.f32.mrb[0].mxu0
    %v922 = vadd.f32 0.0, %v921
    %v923 = vpop.f32.mrb[0].mxu0
    %924 = vdwg.mxu0
    %v926 = vsel %vm582, %v635, 0
    %v929 = vsel %vm582, %v636, 0
    %v932 = vsel %vm582, %v637, 0
    %v935 = vsel %vm582, %v638, 0
    %937 = vmatprep.subr.mxu0 0.0
    %938 = vmatpush1.msra.mxu0 %v450
    %939 = vmatprep.subr.mxu0 0.0
    %940 = vmatpush1.msra.mxu0 %v456
    %941 = vmatprep.subr.mxu0 0.0
    %942 = vmatpush1.msra.mxu0 %v462
    %943 = vmatprep.subr.mxu0 0.0
    %944 = vmatpush1.msra.mxu0 %v468
    %945 = vmatprep.subr.mxu0 0.0
    %946 = vmatpush1.msra.mxu0 0.0
    %947 = vmatprep.subr.mxu0 0.0
    %948 = vmatpush1.msra.mxu0 0.0
    %949 = vmatprep.subr.mxu0 0.0
    %950 = vmatpush1.msra.mxu0 0.0
    %951 = vmatprep.subr.mxu0 0.0
    %952 = vmatpush1.msra.mxu0 0.0
    %953 = vmatprep.subr.mxu0 0.0
    %954 = vmatpush1.msra.mxu0 0.0
    %955 = vmatprep.subr.mxu0 0.0
    %956 = vmatpush1.msra.mxu0 0.0
    %957 = vmatprep.subr.mxu0 0.0
    %958 = vmatpush1.msra.mxu0 0.0
    %959 = vmatprep.subr.mxu0 0.0
    %960 = vmatpush1.msra.mxu0 0.0
    %961 = vmatprep.subr.mxu0 0.0
    %962 = vmatpush1.msra.mxu0 0.0
    %963 = vmatprep.subr.mxu0 0.0
    %964 = vmatpush1.msra.mxu0 0.0
    %965 = vmatprep.subr.mxu0 0.0
    %966 = vmatpush1.msra.mxu0 0.0
    %967 = vmatprep.subr.mxu0 0.0
    %968 = vmatpush1.msra.mxu0 0.0
    %969 = vmatprep.subr.mxu0 0.0
    %970 = vmatpush1.msra.mxu0 0.0
    %971 = vmatprep.subr.mxu0 0.0
    %972 = vmatpush1.msra.mxu0 0.0
    %973 = vmatprep.subr.mxu0 0.0
    %974 = vmatpush1.msra.mxu0 0.0
    %975 = vmatprep.subr.mxu0 0.0
    %976 = vmatpush1.msra.mxu0 0.0
    %977 = vmatprep.subr.mxu0 0.0
    %978 = vmatpush1.msra.mxu0 0.0
    %979 = vmatprep.subr.mxu0 0.0
    %980 = vmatpush1.msra.mxu0 0.0
    %981 = vmatprep.subr.mxu0 0.0
    %982 = vmatpush1.msra.mxu0 0.0
    %983 = vmatprep.subr.mxu0 0.0
    %984 = vmatpush1.msra.mxu0 0.0
    %985 = vmatprep.subr.mxu0 0.0
    %986 = vmatpush1.msra.mxu0 0.0
    %987 = vmatprep.subr.mxu0 0.0
    %988 = vmatpush1.msra.mxu0 0.0
    %989 = vmatprep.subr.mxu0 0.0
    %990 = vmatpush1.msra.mxu0 0.0
    %991 = vmatprep.subr.mxu0 0.0
    %992 = vmatpush1.msra.mxu0 0.0
    %993 = vmatprep.subr.mxu0 0.0
    %994 = vmatpush1.msra.mxu0 0.0
    %995 = vmatprep.subr.mxu0 0.0
    %996 = vmatpush1.msra.mxu0 0.0
    %997 = vmatprep.subr.mxu0 0.0
    %998 = vmatpush1.msra.mxu0 0.0
    %999 = vmatprep.subr.mxu0 0.0
    %1000 = vmatpush1.msra.mxu0 0.0
    %1001 = vmatprep.mubr.f32.mxu0 0.0
    %1002 = vmatmul.mubr.f32.gmra.mrb[0].mxu0 %v926
    %v1003 = vpop.f32.mrb[0].mxu0
    %v1004 = vadd.f32 %v907, %v1003
    %v1005 = vpop.f32.mrb[0].mxu0
    %1006 = vmatprep.mubr.f32.mxu0 0.0
    %1007 = vmatmul.mubr.f32.gmra.mrb[0].mxu0 %v929
    %v1008 = vpop.f32.mrb[0].mxu0
    %v1009 = vadd.f32 %v912, %v1008
    %v1010 = vpop.f32.mrb[0].mxu0
    %1011 = vmatprep.mubr.f32.mxu0 0.0
    %1012 = vmatmul.mubr.f32.gmra.mrb[0].mxu0 %v932
    %v1013 = vpop.f32.mrb[0].mxu0
    %v1014 = vadd.f32 %v917, %v1013
    %v1015 = vpop.f32.mrb[0].mxu0
    %1016 = vmatprep.mubr.f32.mxu0 0.0
    %1017 = vmatmul.mubr.f32.gmra.mrb[0].mxu0 %v935
    %v1018 = vpop.f32.mrb[0].mxu0
    %v1019 = vadd.f32 %v922, %v1018
    %v1020 = vpop.f32.mrb[0].mxu0
    %1021 = vdwg.mxu0
    %1022 = vrot.lane.b32.xlu0 %v256, 96
    %v1023 = vpop.permute.xlu0 %1022
    %1024 = vrot.lane.b32.xlu0 %v261, 96
    %v1025 = vpop.permute.xlu0 %1024
    %1026 = vrot.lane.b32.xlu0 %v266, 96
    %v1027 = vpop.permute.xlu0 %1026
    %1028 = vrot.lane.b32.xlu0 %v271, 96
    %v1029 = vpop.permute.xlu0 %1028
    %1030 = vrot.lane.b32.xlu0 %v349, 96
    %v1031 = vpop.permute.xlu0 %1030
    %1032 = vrot.lane.b32.xlu0 %v354, 96
    %v1033 = vpop.permute.xlu0 %1032
    %1034 = vrot.lane.b32.xlu0 %v359, 96
    %v1035 = vpop.permute.xlu0 %1034
    %1036 = vrot.lane.b32.xlu0 %v364, 96
    %v1037 = vpop.permute.xlu0 %1036
    %v1038 = vsel %vm472, %v1023, 0
    %v1040 = vsel %vm472, %v1025, 0
    %v1042 = vsel %vm472, %v1027, 0
    %v1044 = vsel %vm472, %v1029, 0
    %v1046 = vsel %vm472, %v1031, 0
    %v1048 = vsel %vm472, %v1033, 0
    %v1050 = vsel %vm472, %v1035, 0
    %v1052 = vsel %vm472, %v1037, 0
    %1054 = vmatprep.subr.mxu0 0.0
    %1055 = vmatpush1.xpose.msra.mxu0 %v1046
    %1056 = vmatprep.subr.mxu0 0.0
    %1057 = vmatpush1.xpose.msra.mxu0 %v1048
    %1058 = vmatprep.subr.mxu0 0.0
    %1059 = vmatpush1.xpose.msra.mxu0 %v1050
    %1060 = vmatprep.subr.mxu0 0.0
    %1061 = vmatpush1.xpose.msra.mxu0 %v1052
    %1062 = vmatprep.subr.mxu0 0.0
    %1063 = vmatpush1.xpose.msra.mxu0 0.0
    %1064 = vmatprep.subr.mxu0 0.0
    %1065 = vmatpush1.xpose.msra.mxu0 0.0
    %1066 = vmatprep.subr.mxu0 0.0
    %1067 = vmatpush1.xpose.msra.mxu0 0.0
    %1068 = vmatprep.subr.mxu0 0.0
    %1069 = vmatpush1.xpose.msra.mxu0 0.0
    %1070 = vmatprep.subr.mxu0 0.0
    %1071 = vmatpush1.xpose.msra.mxu0 0.0
    %1072 = vmatprep.subr.mxu0 0.0
    %1073 = vmatpush1.xpose.msra.mxu0 0.0
    %1074 = vmatprep.subr.mxu0 0.0
    %1075 = vmatpush1.xpose.msra.mxu0 0.0
    %1076 = vmatprep.subr.mxu0 0.0
    %1077 = vmatpush1.xpose.msra.mxu0 0.0
    %1078 = vmatprep.subr.mxu0 0.0
    %1079 = vmatpush1.xpose.msra.mxu0 0.0
    %1080 = vmatprep.subr.mxu0 0.0
    %1081 = vmatpush1.xpose.msra.mxu0 0.0
    %1082 = vmatprep.subr.mxu0 0.0
    %1083 = vmatpush1.xpose.msra.mxu0 0.0
    %1084 = vmatprep.subr.mxu0 0.0
    %1085 = vmatpush1.xpose.msra.mxu0 0.0
    %1086 = vmatprep.subr.mxu0 0.0
    %1087 = vmatpush1.xpose.msra.mxu0 0.0
    %1088 = vmatprep.subr.mxu0 0.0
    %1089 = vmatpush1.xpose.msra.mxu0 0.0
    %1090 = vmatprep.subr.mxu0 0.0
    %1091 = vmatpush1.xpose.msra.mxu0 0.0
    %1092 = vmatprep.subr.mxu0 0.0
    %1093 = vmatpush1.xpose.msra.mxu0 0.0
    %1094 = vmatprep.subr.mxu0 0.0
    %1095 = vmatpush1.xpose.msra.mxu0 0.0
    %1096 = vmatprep.subr.mxu0 0.0
    %1097 = vmatpush1.xpose.msra.mxu0 0.0
    %1098 = vmatprep.subr.mxu0 0.0
    %1099 = vmatpush1.xpose.msra.mxu0 0.0
    %1100 = vmatprep.subr.mxu0 0.0
    %1101 = vmatpush1.xpose.msra.mxu0 0.0
    %1102 = vmatprep.subr.mxu0 0.0
    %1103 = vmatpush1.xpose.msra.mxu0 0.0
    %1104 = vmatprep.subr.mxu0 0.0
    %1105 = vmatpush1.xpose.msra.mxu0 0.0
    %1106 = vmatprep.subr.mxu0 0.0
    %1107 = vmatpush1.xpose.msra.mxu0 0.0
    %1108 = vmatprep.subr.mxu0 0.0
    %1109 = vmatpush1.xpose.msra.mxu0 0.0
    %1110 = vmatprep.subr.mxu0 0.0
    %1111 = vmatpush1.xpose.msra.mxu0 0.0
    %1112 = vmatprep.subr.mxu0 0.0
    %1113 = vmatpush1.xpose.msra.mxu0 0.0
    %1114 = vmatprep.subr.mxu0 0.0
    %1115 = vmatpush1.xpose.msra.mxu0 0.0
    %1116 = vmatprep.subr.mxu0 0.0
    %1117 = vmatpush1.xpose.msra.mxu0 0.0
    %1118 = vmatprep.mubr.f32.mxu0 0.0
    %1119 = vmatmul.mubr.f32.gmra.mrb[0].mxu0 %v1038
    %v1120 = vpop.f32.mrb[0].mxu0
    %v1121 = vadd.f32 %v89, %v1120
    %v1122 = vpop.f32.mrb[0].mxu0
    %1123 = vmatprep.mubr.f32.mxu0 0.0
    %1124 = vmatmul.mubr.f32.gmra.mrb[0].mxu0 %v1040
    %v1125 = vpop.f32.mrb[0].mxu0
    %v1126 = vadd.f32 %v90, %v1125
    %v1127 = vpop.f32.mrb[0].mxu0
    %1128 = vmatprep.mubr.f32.mxu0 0.0
    %1129 = vmatmul.mubr.f32.gmra.mrb[0].mxu0 %v1042
    %v1130 = vpop.f32.mrb[0].mxu0
    %v1131 = vadd.f32 %v91, %v1130
    %v1132 = vpop.f32.mrb[0].mxu0
    %1133 = vmatprep.mubr.f32.mxu0 0.0
    %1134 = vmatmul.mubr.f32.gmra.mrb[0].mxu0 %v1044
    %v1135 = vpop.f32.mrb[0].mxu0
    %v1136 = vadd.f32 %v92, %v1135
    %v1137 = vpop.f32.mrb[0].mxu0
    %1138 = vdwg.mxu0
    %v1139 = vsel %vm582, %v1121, -inf
    %1140 = vmax.xlane.f32.xlu0 %v1139
    %v1141 = vpop.xlane.xlu0 %1140
    %v1142 = vsel %vm582, %v1126, -inf
    %1143 = vmax.xlane.f32.xlu0 %v1142
    %v1144 = vpop.xlane.xlu0 %1143
    %v1145 = vsel %vm582, %v1131, -inf
    %1146 = vmax.xlane.f32.xlu0 %v1145
    %v1147 = vpop.xlane.xlu0 %1146
    %v1148 = vsel %vm582, %v1136, -inf
    %1149 = vmax.xlane.f32.xlu0 %v1148
    %v1150 = vpop.xlane.xlu0 %1149
    %v1151 = vsub.f32 %v1121, %v1141
    %v1152 = vsub.f32 %v1126, %v1144
    %v1153 = vsub.f32 %v1131, %v1147
    %v1154 = vsub.f32 %v1136, %v1150
    %v1155 = vmul.f32 %v1151, 1.442695
    %v1156 = vpow.pop %v1155
    %v1157 = vmul.f32 %v1152, 1.442695
    %v1158 = vpow.pop %v1157
    %v1159 = vmul.f32 %v1153, 1.442695
    %v1160 = vpow.pop %v1159
    %v1161 = vmul.f32 %v1154, 1.442695
    %v1162 = vpow.pop %v1161
    %v1163 = vsel %vm582, %v1156, 0.0
    %1164 = vadd.xlane.f32.xlu0 %v1163
    %v1165 = vpop.xlane.xlu0 %1164
    %v1166 = vsel %vm582, %v1158, 0.0
    %1167 = vadd.xlane.f32.xlu0 %v1166
    %v1168 = vpop.xlane.xlu0 %1167
    %v1169 = vsel %vm582, %v1160, 0.0
    %1170 = vadd.xlane.f32.xlu0 %v1169
    %v1171 = vpop.xlane.xlu0 %1170
    %v1172 = vsel %vm582, %v1162, 0.0
    %1173 = vadd.xlane.f32.xlu0 %v1172
    %v1174 = vpop.xlane.xlu0 %1173
    %v1175 = vrcp.pop %v1165
    %v1176 = vrcp.pop %v1168
    %v1177 = vrcp.pop %v1171
    %v1178 = vrcp.pop %v1174
    %v1179 = vmul.f32 %v1165, %v1175
    %v1180 = vmul.f32 %v1168, %v1176
    %v1181 = vmul.f32 %v1171, %v1177
    %v1182 = vmul.f32 %v1174, %v1178
    %v1183 = vsub.f32 2.0, %v1179
    %v1184 = vsub.f32 2.0, %v1180
    %v1185 = vsub.f32 2.0, %v1181
    %v1186 = vsub.f32 2.0, %v1182
    %v1187 = vmul.f32 %v1175, %v1183
    %v1188 = vmul.f32 %v1176, %v1184
    %v1189 = vmul.f32 %v1177, %v1185
    %v1190 = vmul.f32 %v1178, %v1186
    %v1191 = vmul.f32 %v1156, %v1187
    %v1192 = vmul.f32 %v1158, %v1188
    %v1193 = vmul.f32 %v1160, %v1189
    %v1194 = vmul.f32 %v1162, %v1190
    %v1196 = vsel %vm582, %v1191, 0
    %v1199 = vsel %vm582, %v1192, 0
    %v1202 = vsel %vm582, %v1193, 0
    %v1205 = vsel %vm582, %v1194, 0
    %1207 = vmatprep.subr.mxu0 0.0
    %1208 = vmatpush1.msra.mxu0 %v452
    %1209 = vmatprep.subr.mxu0 0.0
    %1210 = vmatpush1.msra.mxu0 %v458
    %1211 = vmatprep.subr.mxu0 0.0
    %1212 = vmatpush1.msra.mxu0 %v464
    %1213 = vmatprep.subr.mxu0 0.0
    %1214 = vmatpush1.msra.mxu0 %v470
    %1215 = vmatprep.subr.mxu0 0.0
    %1216 = vmatpush1.msra.mxu0 0.0
    %1217 = vmatprep.subr.mxu0 0.0
    %1218 = vmatpush1.msra.mxu0 0.0
    %1219 = vmatprep.subr.mxu0 0.0
    %1220 = vmatpush1.msra.mxu0 0.0
    %1221 = vmatprep.subr.mxu0 0.0
    %1222 = vmatpush1.msra.mxu0 0.0
    %1223 = vmatprep.subr.mxu0 0.0
    %1224 = vmatpush1.msra.mxu0 0.0
    %1225 = vmatprep.subr.mxu0 0.0
    %1226 = vmatpush1.msra.mxu0 0.0
    %1227 = vmatprep.subr.mxu0 0.0
    %1228 = vmatpush1.msra.mxu0 0.0
    %1229 = vmatprep.subr.mxu0 0.0
    %1230 = vmatpush1.msra.mxu0 0.0
    %1231 = vmatprep.subr.mxu0 0.0
    %1232 = vmatpush1.msra.mxu0 0.0
    %1233 = vmatprep.subr.mxu0 0.0
    %1234 = vmatpush1.msra.mxu0 0.0
    %1235 = vmatprep.subr.mxu0 0.0
    %1236 = vmatpush1.msra.mxu0 0.0
    %1237 = vmatprep.subr.mxu0 0.0
    %1238 = vmatpush1.msra.mxu0 0.0
    %1239 = vmatprep.subr.mxu0 0.0
    %1240 = vmatpush1.msra.mxu0 0.0
    %1241 = vmatprep.subr.mxu0 0.0
    %1242 = vmatpush1.msra.mxu0 0.0
    %1243 = vmatprep.subr.mxu0 0.0
    %1244 = vmatpush1.msra.mxu0 0.0
    %1245 = vmatprep.subr.mxu0 0.0
    %1246 = vmatpush1.msra.mxu0 0.0
    %1247 = vmatprep.subr.mxu0 0.0
    %1248 = vmatpush1.msra.mxu0 0.0
    %1249 = vmatprep.subr.mxu0 0.0
    %1250 = vmatpush1.msra.mxu0 0.0
    %1251 = vmatprep.subr.mxu0 0.0
    %1252 = vmatpush1.msra.mxu0 0.0
    %1253 = vmatprep.subr.mxu0 0.0
    %1254 = vmatpush1.msra.mxu0 0.0
    %1255 = vmatprep.subr.mxu0 0.0
    %1256 = vmatpush1.msra.mxu0 0.0
    %1257 = vmatprep.subr.mxu0 0.0
    %1258 = vmatpush1.msra.mxu0 0.0
    %1259 = vmatprep.subr.mxu0 0.0
    %1260 = vmatpush1.msra.mxu0 0.0
    %1261 = vmatprep.subr.mxu0 0.0
    %1262 = vmatpush1.msra.mxu0 0.0
    %1263 = vmatprep.subr.mxu0 0.0
    %1264 = vmatpush1.msra.mxu0 0.0
    %1265 = vmatprep.subr.mxu0 0.0
    %1266 = vmatpush1.msra.mxu0 0.0
    %1267 = vmatprep.subr.mxu0 0.0
    %1268 = vmatpush1.msra.mxu0 0.0
    %1269 = vmatprep.subr.mxu0 0.0
    %1270 = vmatpush1.msra.mxu0 0.0
    %1271 = vmatprep.mubr.f32.mxu0 0.0
    %1272 = vmatmul.mubr.f32.gmra.mrb[0].mxu0 %v1196
    %v1273 = vpop.f32.mrb[0].mxu0
    %v1274 = vadd.f32 0.0, %v1273
    %v1275 = vpop.f32.mrb[0].mxu0
    %1276 = vmatprep.mubr.f32.mxu0 0.0
    %1277 = vmatmul.mubr.f32.gmra.mrb[0].mxu0 %v1199
    %v1278 = vpop.f32.mrb[0].mxu0
    %v1279 = vadd.f32 0.0, %v1278
    %v1280 = vpop.f32.mrb[0].mxu0
    %1281 = vmatprep.mubr.f32.mxu0 0.0
    %1282 = vmatmul.mubr.f32.gmra.mrb[0].mxu0 %v1202
    %v1283 = vpop.f32.mrb[0].mxu0
    %v1284 = vadd.f32 0.0, %v1283
    %v1285 = vpop.f32.mrb[0].mxu0
    %1286 = vmatprep.mubr.f32.mxu0 0.0
    %1287 = vmatmul.mubr.f32.gmra.mrb[0].mxu0 %v1205
    %v1288 = vpop.f32.mrb[0].mxu0
    %v1289 = vadd.f32 0.0, %v1288
    %v1290 = vpop.f32.mrb[0].mxu0
    %1291 = vdwg.mxu0
    %v1292 = vadd.f32 %v1004, %v1274
    %v1293 = vadd.f32 %v1009, %v1279
    %v1294 = vadd.f32 %v1014, %v1284
    %v1295 = vadd.f32 %v1019, %v1289
    %1296 = vrot.lane.b32.xlu0 %v256, 80
    %v1297 = vpop.permute.xlu0 %1296
    %1298 = vrot.lane.b32.xlu0 %v261, 80
    %v1299 = vpop.permute.xlu0 %1298
    %1300 = vrot.lane.b32.xlu0 %v266, 80
    %v1301 = vpop.permute.xlu0 %1300
    %1302 = vrot.lane.b32.xlu0 %v271, 80
    %v1303 = vpop.permute.xlu0 %1302
    %1304 = vrot.lane.b32.xlu0 %v349, 80
    %v1305 = vpop.permute.xlu0 %1304
    %1306 = vrot.lane.b32.xlu0 %v354, 80
    %v1307 = vpop.permute.xlu0 %1306
    %1308 = vrot.lane.b32.xlu0 %v359, 80
    %v1309 = vpop.permute.xlu0 %1308
    %1310 = vrot.lane.b32.xlu0 %v364, 80
    %v1311 = vpop.permute.xlu0 %1310
    %v1312 = vsel %vm472, %v1297, 0
    %v1314 = vsel %vm472, %v1299, 0
    %v1316 = vsel %vm472, %v1301, 0
    %v1318 = vsel %vm472, %v1303, 0
    %v1320 = vsel %vm472, %v1305, 0
    %v1322 = vsel %vm472, %v1307, 0
    %v1324 = vsel %vm472, %v1309, 0
    %v1326 = vsel %vm472, %v1311, 0
    %1328 = vmatprep.subr.mxu0 0.0
    %1329 = vmatpush1.xpose.msra.mxu0 %v1320
    %1330 = vmatprep.subr.mxu0 0.0
    %1331 = vmatpush1.xpose.msra.mxu0 %v1322
    %1332 = vmatprep.subr.mxu0 0.0
    %1333 = vmatpush1.xpose.msra.mxu0 %v1324
    %1334 = vmatprep.subr.mxu0 0.0
    %1335 = vmatpush1.xpose.msra.mxu0 %v1326
    %1336 = vmatprep.subr.mxu0 0.0
    %1337 = vmatpush1.xpose.msra.mxu0 0.0
    %1338 = vmatprep.subr.mxu0 0.0
    %1339 = vmatpush1.xpose.msra.mxu0 0.0
    %1340 = vmatprep.subr.mxu0 0.0
    %1341 = vmatpush1.xpose.msra.mxu0 0.0
    %1342 = vmatprep.subr.mxu0 0.0
    %1343 = vmatpush1.xpose.msra.mxu0 0.0
    %1344 = vmatprep.subr.mxu0 0.0
    %1345 = vmatpush1.xpose.msra.mxu0 0.0
    %1346 = vmatprep.subr.mxu0 0.0
    %1347 = vmatpush1.xpose.msra.mxu0 0.0
    %1348 = vmatprep.subr.mxu0 0.0
    %1349 = vmatpush1.xpose.msra.mxu0 0.0
    %1350 = vmatprep.subr.mxu0 0.0
    %1351 = vmatpush1.xpose.msra.mxu0 0.0
    %1352 = vmatprep.subr.mxu0 0.0
    %1353 = vmatpush1.xpose.msra.mxu0 0.0
    %1354 = vmatprep.subr.mxu0 0.0
    %1355 = vmatpush1.xpose.msra.mxu0 0.0
    %1356 = vmatprep.subr.mxu0 0.0
    %1357 = vmatpush1.xpose.msra.mxu0 0.0
    %1358 = vmatprep.subr.mxu0 0.0
    %1359 = vmatpush1.xpose.msra.mxu0 0.0
    %1360 = vmatprep.subr.mxu0 0.0
    %1361 = vmatpush1.xpose.msra.mxu0 0.0
    %1362 = vmatprep.subr.mxu0 0.0
    %1363 = vmatpush1.xpose.msra.mxu0 0.0
    %1364 = vmatprep.subr.mxu0 0.0
    %1365 = vmatpush1.xpose.msra.mxu0 0.0
    %1366 = vmatprep.subr.mxu0 0.0
    %1367 = vmatpush1.xpose.msra.mxu0 0.0
    %1368 = vmatprep.subr.mxu0 0.0
    %1369 = vmatpush1.xpose.msra.mxu0 0.0
    %1370 = vmatprep.subr.mxu0 0.0
    %1371 = vmatpush1.xpose.msra.mxu0 0.0
    %1372 = vmatprep.subr.mxu0 0.0
    %1373 = vmatpush1.xpose.msra.mxu0 0.0
    %1374 = vmatprep.subr.mxu0 0.0
    %1375 = vmatpush1.xpose.msra.mxu0 0.0
    %1376 = vmatprep.subr.mxu0 0.0
    %1377 = vmatpush1.xpose.msra.mxu0 0.0
    %1378 = vmatprep.subr.mxu0 0.0
    %1379 = vmatpush1.xpose.msra.mxu0 0.0
    %1380 = vmatprep.subr.mxu0 0.0
    %1381 = vmatpush1.xpose.msra.mxu0 0.0
    %1382 = vmatprep.subr.mxu0 0.0
    %1383 = vmatpush1.xpose.msra.mxu0 0.0
    %1384 = vmatprep.subr.mxu0 0.0
    %1385 = vmatpush1.xpose.msra.mxu0 0.0
    %1386 = vmatprep.subr.mxu0 0.0
    %1387 = vmatpush1.xpose.msra.mxu0 0.0
    %1388 = vmatprep.subr.mxu0 0.0
    %1389 = vmatpush1.xpose.msra.mxu0 0.0
    %1390 = vmatprep.subr.mxu0 0.0
    %1391 = vmatpush1.xpose.msra.mxu0 0.0
    %1392 = vmatprep.mubr.f32.mxu0 0.0
    %1393 = vmatmul.mubr.f32.gmra.mrb[0].mxu0 %v1312
    %v1394 = vpop.f32.mrb[0].mxu0
    %v1395 = vadd.f32 %v89, %v1394
    %v1396 = vpop.f32.mrb[0].mxu0
    %1397 = vmatprep.mubr.f32.mxu0 0.0
    %1398 = vmatmul.mubr.f32.gmra.mrb[0].mxu0 %v1314
    %v1399 = vpop.f32.mrb[0].mxu0
    %v1400 = vadd.f32 %v90, %v1399
    %v1401 = vpop.f32.mrb[0].mxu0
    %1402 = vmatprep.mubr.f32.mxu0 0.0
    %1403 = vmatmul.mubr.f32.gmra.mrb[0].mxu0 %v1316
    %v1404 = vpop.f32.mrb[0].mxu0
    %v1405 = vadd.f32 %v91, %v1404
    %v1406 = vpop.f32.mrb[0].mxu0
    %1407 = vmatprep.mubr.f32.mxu0 0.0
    %1408 = vmatmul.mubr.f32.gmra.mrb[0].mxu0 %v1318
    %v1409 = vpop.f32.mrb[0].mxu0
    %v1410 = vadd.f32 %v92, %v1409
    %v1411 = vpop.f32.mrb[0].mxu0
    %1412 = vdwg.mxu0
    %v1413 = vsel %vm582, %v1395, -inf
    %1414 = vmax.xlane.f32.xlu0 %v1413
    %v1415 = vpop.xlane.xlu0 %1414
    %v1416 = vsel %vm582, %v1400, -inf
    %1417 = vmax.xlane.f32.xlu0 %v1416
    %v1418 = vpop.xlane.xlu0 %1417
    %v1419 = vsel %vm582, %v1405, -inf
    %1420 = vmax.xlane.f32.xlu0 %v1419
    %v1421 = vpop.xlane.xlu0 %1420
    %v1422 = vsel %vm582, %v1410, -inf
    %1423 = vmax.xlane.f32.xlu0 %v1422
    %v1424 = vpop.xlane.xlu0 %1423
    %v1425 = vsub.f32 %v1395, %v1415
    %v1426 = vsub.f32 %v1400, %v1418
    %v1427 = vsub.f32 %v1405, %v1421
    %v1428 = vsub.f32 %v1410, %v1424
    %v1429 = vmul.f32 %v1425, 1.442695
    %v1430 = vpow.pop %v1429
    %v1431 = vmul.f32 %v1426, 1.442695
    %v1432 = vpow.pop %v1431
    %v1433 = vmul.f32 %v1427, 1.442695
    %v1434 = vpow.pop %v1433
    %v1435 = vmul.f32 %v1428, 1.442695
    %v1436 = vpow.pop %v1435
    %v1437 = vsel %vm582, %v1430, 0.0
    %1438 = vadd.xlane.f32.xlu0 %v1437
    %v1439 = vpop.xlane.xlu0 %1438
    %v1440 = vsel %vm582, %v1432, 0.0
    %1441 = vadd.xlane.f32.xlu0 %v1440
    %v1442 = vpop.xlane.xlu0 %1441
    %v1443 = vsel %vm582, %v1434, 0.0
    %1444 = vadd.xlane.f32.xlu0 %v1443
    %v1445 = vpop.xlane.xlu0 %1444
    %v1446 = vsel %vm582, %v1436, 0.0
    %1447 = vadd.xlane.f32.xlu0 %v1446
    %v1448 = vpop.xlane.xlu0 %1447
    %v1449 = vrcp.pop %v1439
    %v1450 = vrcp.pop %v1442
    %v1451 = vrcp.pop %v1445
    %v1452 = vrcp.pop %v1448
    %v1453 = vmul.f32 %v1439, %v1449
    %v1454 = vmul.f32 %v1442, %v1450
    %v1455 = vmul.f32 %v1445, %v1451
    %v1456 = vmul.f32 %v1448, %v1452
    %v1457 = vsub.f32 2.0, %v1453
    %v1458 = vsub.f32 2.0, %v1454
    %v1459 = vsub.f32 2.0, %v1455
    %v1460 = vsub.f32 2.0, %v1456
    %v1461 = vmul.f32 %v1449, %v1457
    %v1462 = vmul.f32 %v1450, %v1458
    %v1463 = vmul.f32 %v1451, %v1459
    %v1464 = vmul.f32 %v1452, %v1460
    %v1465 = vmul.f32 %v1430, %v1461
    %v1466 = vmul.f32 %v1432, %v1462
    %v1467 = vmul.f32 %v1434, %v1463
    %v1468 = vmul.f32 %v1436, %v1464
    %1473 = vrot.lane.b32.xlu0 %v452, 64
    %v1474 = vpop.permute.xlu0 %1473
    %1475 = vrot.lane.b32.xlu0 %v458, 64
    %v1476 = vpop.permute.xlu0 %1475
    %1477 = vrot.lane.b32.xlu0 %v464, 64
    %v1478 = vpop.permute.xlu0 %1477
    %1479 = vrot.lane.b32.xlu0 %v470, 64
    %v1480 = vpop.permute.xlu0 %1479
    %v1486 = vsel %vm582, %v1465, 0
    %v1489 = vsel %vm582, %v1466, 0
    %v1492 = vsel %vm582, %v1467, 0
    %v1495 = vsel %vm582, %v1468, 0
    %1497 = vmatprep.subr.mxu0 0.0
    %1498 = vmatpush1.msra.mxu0 %v1474
    %1499 = vmatprep.subr.mxu0 0.0
    %1500 = vmatpush1.msra.mxu0 %v1476
    %1501 = vmatprep.subr.mxu0 0.0
    %1502 = vmatpush1.msra.mxu0 %v1478
    %1503 = vmatprep.subr.mxu0 0.0
    %1504 = vmatpush1.msra.mxu0 %v1480
    %1505 = vmatprep.subr.mxu0 0.0
    %1506 = vmatpush1.msra.mxu0 0.0
    %1507 = vmatprep.subr.mxu0 0.0
    %1508 = vmatpush1.msra.mxu0 0.0
    %1509 = vmatprep.subr.mxu0 0.0
    %1510 = vmatpush1.msra.mxu0 0.0
    %1511 = vmatprep.subr.mxu0 0.0
    %1512 = vmatpush1.msra.mxu0 0.0
    %1513 = vmatprep.subr.mxu0 0.0
    %1514 = vmatpush1.msra.mxu0 0.0
    %1515 = vmatprep.subr.mxu0 0.0
    %1516 = vmatpush1.msra.mxu0 0.0
    %1517 = vmatprep.subr.mxu0 0.0
    %1518 = vmatpush1.msra.mxu0 0.0
    %1519 = vmatprep.subr.mxu0 0.0
    %1520 = vmatpush1.msra.mxu0 0.0
    %1521 = vmatprep.subr.mxu0 0.0
    %1522 = vmatpush1.msra.mxu0 0.0
    %1523 = vmatprep.subr.mxu0 0.0
    %1524 = vmatpush1.msra.mxu0 0.0
    %1525 = vmatprep.subr.mxu0 0.0
    %1526 = vmatpush1.msra.mxu0 0.0
    %1527 = vmatprep.subr.mxu0 0.0
    %1528 = vmatpush1.msra.mxu0 0.0
    %1529 = vmatprep.subr.mxu0 0.0
    %1530 = vmatpush1.msra.mxu0 0.0
    %1531 = vmatprep.subr.mxu0 0.0
    %1532 = vmatpush1.msra.mxu0 0.0
    %1533 = vmatprep.subr.mxu0 0.0
    %1534 = vmatpush1.msra.mxu0 0.0
    %1535 = vmatprep.subr.mxu0 0.0
    %1536 = vmatpush1.msra.mxu0 0.0
    %1537 = vmatprep.subr.mxu0 0.0
    %1538 = vmatpush1.msra.mxu0 0.0
    %1539 = vmatprep.subr.mxu0 0.0
    %1540 = vmatpush1.msra.mxu0 0.0
    %1541 = vmatprep.subr.mxu0 0.0
    %1542 = vmatpush1.msra.mxu0 0.0
    %1543 = vmatprep.subr.mxu0 0.0
    %1544 = vmatpush1.msra.mxu0 0.0
    %1545 = vmatprep.subr.mxu0 0.0
    %1546 = vmatpush1.msra.mxu0 0.0
    %1547 = vmatprep.subr.mxu0 0.0
    %1548 = vmatpush1.msra.mxu0 0.0
    %1549 = vmatprep.subr.mxu0 0.0
    %1550 = vmatpush1.msra.mxu0 0.0
    %1551 = vmatprep.subr.mxu0 0.0
    %1552 = vmatpush1.msra.mxu0 0.0
    %1553 = vmatprep.subr.mxu0 0.0
    %1554 = vmatpush1.msra.mxu0 0.0
    %1555 = vmatprep.subr.mxu0 0.0
    %1556 = vmatpush1.msra.mxu0 0.0
    %1557 = vmatprep.subr.mxu0 0.0
    %1558 = vmatpush1.msra.mxu0 0.0
    %1559 = vmatprep.subr.mxu0 0.0
    %1560 = vmatpush1.msra.mxu0 0.0
    %1561 = vmatprep.mubr.f32.mxu0 0.0
    %1562 = vmatmul.mubr.f32.gmra.mrb[0].mxu0 %v1486
    %v1563 = vpop.f32.mrb[0].mxu0
    %v1564 = vadd.f32 0.0, %v1563
    %v1565 = vpop.f32.mrb[0].mxu0
    %1566 = vmatprep.mubr.f32.mxu0 0.0
    %1567 = vmatmul.mubr.f32.gmra.mrb[0].mxu0 %v1489
    %v1568 = vpop.f32.mrb[0].mxu0
    %v1569 = vadd.f32 0.0, %v1568
    %v1570 = vpop.f32.mrb[0].mxu0
    %1571 = vmatprep.mubr.f32.mxu0 0.0
    %1572 = vmatmul.mubr.f32.gmra.mrb[0].mxu0 %v1492
    %v1573 = vpop.f32.mrb[0].mxu0
    %v1574 = vadd.f32 0.0, %v1573
    %v1575 = vpop.f32.mrb[0].mxu0
    %1576 = vmatprep.mubr.f32.mxu0 0.0
    %1577 = vmatmul.mubr.f32.gmra.mrb[0].mxu0 %v1495
    %v1578 = vpop.f32.mrb[0].mxu0
    %v1579 = vadd.f32 0.0, %v1578
    %v1580 = vpop.f32.mrb[0].mxu0
    %1581 = vdwg.mxu0
    %v1582 = vadd.f32 %v1292, %v1564
    %v1583 = vadd.f32 %v1293, %v1569
    %v1584 = vadd.f32 %v1294, %v1574
    %v1585 = vadd.f32 %v1295, %v1579
    %v1586 = vadd.f32 %v85, %v1582
    %v1587 = vadd.f32 %v86, %v1583
    %v1588 = vadd.f32 %v87, %v1584
    %v1589 = vadd.f32 %v88, %v1585
    %v1590 = vld [vmem:[%s7] sm:$0x1]
    %v1592 = vlaneseq
    %v1593 = vshrl.u32 %v1592, 7
    %v1594 = vsub.s32 0, %v1593
    %v1595 = vrot.slane %v1590, %v1594
    %v1597 = vadd.f32 %v1586, %v1595
    %v1598 = vadd.f32 %v1587, %v1595
    %v1599 = vadd.f32 %v1588, %v1595
    %v1600 = vadd.f32 %v1589, %v1595
    %v1601 = vsel %vm93, %v1597, 0.0
    %1602 = vadd.xlane.f32.xlu0 %v1601
    %v1603 = vpop.xlane.xlu0 %1602
    %v1604 = vsel %vm93, %v1598, 0.0
    %1605 = vadd.xlane.f32.xlu0 %v1604
    %v1606 = vpop.xlane.xlu0 %1605
    %v1607 = vsel %vm93, %v1599, 0.0
    %1608 = vadd.xlane.f32.xlu0 %v1607
    %v1609 = vpop.xlane.xlu0 %1608
    %v1610 = vsel %vm93, %v1600, 0.0
    %1611 = vadd.xlane.f32.xlu0 %v1610
    %v1612 = vpop.xlane.xlu0 %1611
    %v1613 = vmul.f32 %v1603, %v106
    %v1614 = vmul.f32 %v1606, %v106
    %v1615 = vmul.f32 %v1609, %v106
    %v1616 = vmul.f32 %v1612, %v106
    %v1617 = vsub.f32 %v1597, %v1613
    %v1618 = vsub.f32 %v1598, %v1614
    %v1619 = vsub.f32 %v1599, %v1615
    %v1620 = vsub.f32 %v1600, %v1616
    %v1621 = vmul.f32 %v1617, %v1617
    %v1622 = vmul.f32 %v1618, %v1618
    %v1623 = vmul.f32 %v1619, %v1619
    %v1624 = vmul.f32 %v1620, %v1620
    %v1625 = vsel %vm93, %v1621, 0.0
    %1626 = vadd.xlane.f32.xlu0 %v1625
    %v1627 = vpop.xlane.xlu0 %1626
    %v1628 = vsel %vm93, %v1622, 0.0
    %1629 = vadd.xlane.f32.xlu0 %v1628
    %v1630 = vpop.xlane.xlu0 %1629
    %v1631 = vsel %vm93, %v1623, 0.0
    %1632 = vadd.xlane.f32.xlu0 %v1631
    %v1633 = vpop.xlane.xlu0 %1632
    %v1634 = vsel %vm93, %v1624, 0.0
    %1635 = vadd.xlane.f32.xlu0 %v1634
    %v1636 = vpop.xlane.xlu0 %1635
    %v1637 = vmul.f32 %v1627, %v106
    %v1638 = vmul.f32 %v1630, %v106
    %v1639 = vmul.f32 %v1633, %v106
    %v1640 = vmul.f32 %v1636, %v106
    %v1641 = vadd.f32 %v1637, 1e-05
    %v1642 = vadd.f32 %v1638, 1e-05
    %v1643 = vadd.f32 %v1639, 1e-05
    %v1644 = vadd.f32 %v1640, 1e-05
    %v1645 = vrsqrt.pop %v1641
    %v1646 = vrsqrt.pop %v1642
    %v1647 = vrsqrt.pop %v1643
    %v1648 = vrsqrt.pop %v1644
    %v1649 = vmul.f32 %v1617, %v1645
    %v1650 = vmul.f32 %v1618, %v1646
    %v1651 = vmul.f32 %v1619, %v1647
    %v1652 = vmul.f32 %v1620, %v1648
    %v1653 = vld [vmem:[#allocation5] sm:$0x1]
    %v1655 = vlaneseq
    %v1656 = vshrl.u32 %v1655, 7
    %v1657 = vsub.s32 0, %v1656
    %v1658 = vrot.slane %v1653, %v1657
    %v1660 = vmul.f32 %v1649, %v1658
    %v1661 = vmul.f32 %v1650, %v1658
    %v1662 = vmul.f32 %v1651, %v1658
    %v1663 = vmul.f32 %v1652, %v1658
    %v1664 = vld [vmem:[#allocation7] sm:$0x1]
    %v1666 = vlaneseq
    %v1667 = vshrl.u32 %v1666, 7
    %v1668 = vsub.s32 0, %v1667
    %v1669 = vrot.slane %v1664, %v1668
    %v1671 = vadd.f32 %v1660, %v1669
    %v1672 = vadd.f32 %v1661, %v1669
    %v1673 = vadd.f32 %v1662, %v1669
    %v1674 = vadd.f32 %v1663, %v1669
    %v1675 = vld [vmem:[%s10] sm:$0xff]
    %v1676 = vld [vmem:[%s10 + $0x8] sm:$0xff]
    %v1677 = vld [vmem:[%s10 + $0x10] sm:$0xff]
    %v1678 = vld [vmem:[%s10 + $0x18] sm:$0xff]
    %v1679 = vld [vmem:[%s10 + $0x20] sm:$0xff]
    %v1680 = vld [vmem:[%s10 + $0x28] sm:$0xff]
    %v1681 = vld [vmem:[%s10 + $0x30] sm:$0xff]
    %v1682 = vld [vmem:[%s10 + $0x38] sm:$0xff]
    %v1683 = vld [vmem:[%s10 + $0x40] sm:$0xff]
    %v1684 = vld [vmem:[%s10 + $0x48] sm:$0xff]
    %v1685 = vld [vmem:[%s10 + $0x50] sm:$0xff]
    %v1686 = vld [vmem:[%s10 + $0x58] sm:$0xff]
    %v1687 = vld [vmem:[%s10 + $0x60] sm:$0xff]
    %v1688 = vld [vmem:[%s10 + $0x68] sm:$0xff]
    %v1689 = vld [vmem:[%s10 + $0x70] sm:$0xff]
    %v1690 = vld [vmem:[%s10 + $0x78] sm:$0xff]
    %v1691 = vld [vmem:[%s11] sm:$0x3]
    %v1693 = vlaneseq
    %v1694 = vshrl.u32 %v1693, 7
    %v1695 = vsub.s32 0, %v1694
    %v1696 = vrot.slane %v1691, %v1695
    %v1697 = vlaneseq
    %v1698 = vshrl.u32 %v1697, 7
    %v1699 = vsub.s32 1, %v1698
    %v1700 = vrot.slane %v1691, %v1699
    %v1704 = vsel %vm93, %v1671, 0
    %v1707 = vsel %vm93, %v1672, 0
    %v1710 = vsel %vm93, %v1673, 0
    %v1713 = vsel %vm93, %v1674, 0
    %1715 = vmatprep.subr.mxu0 %v1676
    %1716 = vmatpush1.msra.mxu0 %v1675
    %1717 = vmatprep.subr.mxu0 %v1678
    %1718 = vmatpush1.msra.mxu0 %v1677
    %1719 = vmatprep.subr.mxu0 %v1680
    %1720 = vmatpush1.msra.mxu0 %v1679
    %1721 = vmatprep.subr.mxu0 %v1682
    %1722 = vmatpush1.msra.mxu0 %v1681
    %1723 = vmatprep.subr.mxu0 %v1684
    %1724 = vmatpush1.msra.mxu0 %v1683
    %1725 = vmatprep.subr.mxu0 %v1686
    %1726 = vmatpush1.msra.mxu0 %v1685
    %1727 = vmatprep.subr.mxu0 %v1688
    %1728 = vmatpush1.msra.mxu0 %v1687
    %1729 = vmatprep.subr.mxu0 %v1690
    %1730 = vmatpush1.msra.mxu0 %v1689
    %1731 = vmatprep.subr.mxu0 0.0
    %1732 = vmatpush1.msra.mxu0 0.0
    %1733 = vmatprep.subr.mxu0 0.0
    %1734 = vmatpush1.msra.mxu0 0.0
    %1735 = vmatprep.subr.mxu0 0.0
    %1736 = vmatpush1.msra.mxu0 0.0
    %1737 = vmatprep.subr.mxu0 0.0
    %1738 = vmatpush1.msra.mxu0 0.0
    %1739 = vmatprep.subr.mxu0 0.0
    %1740 = vmatpush1.msra.mxu0 0.0
    %1741 = vmatprep.subr.mxu0 0.0
    %1742 = vmatpush1.msra.mxu0 0.0
    %1743 = vmatprep.subr.mxu0 0.0
    %1744 = vmatpush1.msra.mxu0 0.0
    %1745 = vmatprep.subr.mxu0 0.0
    %1746 = vmatpush1.msra.mxu0 0.0
    %1747 = vmatprep.subr.mxu0 0.0
    %1748 = vmatpush1.msra.mxu0 0.0
    %1749 = vmatprep.subr.mxu0 0.0
    %1750 = vmatpush1.msra.mxu0 0.0
    %1751 = vmatprep.subr.mxu0 0.0
    %1752 = vmatpush1.msra.mxu0 0.0
    %1753 = vmatprep.subr.mxu0 0.0
    %1754 = vmatpush1.msra.mxu0 0.0
    %1755 = vmatprep.subr.mxu0 0.0
    %1756 = vmatpush1.msra.mxu0 0.0
    %1757 = vmatprep.subr.mxu0 0.0
    %1758 = vmatpush1.msra.mxu0 0.0
    %1759 = vmatprep.subr.mxu0 0.0
    %1760 = vmatpush1.msra.mxu0 0.0
    %1761 = vmatprep.subr.mxu0 0.0
    %1762 = vmatpush1.msra.mxu0 0.0
    %1763 = vmatprep.subr.mxu0 0.0
    %1764 = vmatpush1.msra.mxu0 0.0
    %1765 = vmatprep.subr.mxu0 0.0
    %1766 = vmatpush1.msra.mxu0 0.0
    %1767 = vmatprep.subr.mxu0 0.0
    %1768 = vmatpush1.msra.mxu0 0.0
    %1769 = vmatprep.subr.mxu0 0.0
    %1770 = vmatpush1.msra.mxu0 0.0
    %1771 = vmatprep.subr.mxu0 0.0
    %1772 = vmatpush1.msra.mxu0 0.0
    %1773 = vmatprep.subr.mxu0 0.0
    %1774 = vmatpush1.msra.mxu0 0.0
    %1775 = vmatprep.subr.mxu0 0.0
    %1776 = vmatpush1.msra.mxu0 0.0
    %1777 = vmatprep.subr.mxu0 0.0
    %1778 = vmatpush1.msra.mxu0 0.0
    %1779 = vmatprep.mubr.f32.mxu0 0.0
    %1780 = vmatmul.mubr.f32.gmra.mrb[0].mxu0 %v1704
    %v1781 = vpop.f32.mrb[0].mxu0
    %v1782 = vadd.f32 %v1696, %v1781
    %v1783 = vpop.f32.mrb[0].mxu0
    %v1784 = vadd.f32 %v1700, %v1783
    %1785 = vmatprep.mubr.f32.mxu0 0.0
    %1786 = vmatmul.mubr.f32.gmra.mrb[0].mxu0 %v1707
    %v1787 = vpop.f32.mrb[0].mxu0
    %v1788 = vadd.f32 %v1696, %v1787
    %v1789 = vpop.f32.mrb[0].mxu0
    %v1790 = vadd.f32 %v1700, %v1789
    %1791 = vmatprep.mubr.f32.mxu0 0.0
    %1792 = vmatmul.mubr.f32.gmra.mrb[0].mxu0 %v1710
    %v1793 = vpop.f32.mrb[0].mxu0
    %v1794 = vadd.f32 %v1696, %v1793
    %v1795 = vpop.f32.mrb[0].mxu0
    %v1796 = vadd.f32 %v1700, %v1795
    %1797 = vmatprep.mubr.f32.mxu0 0.0
    %1798 = vmatmul.mubr.f32.gmra.mrb[0].mxu0 %v1713
    %v1799 = vpop.f32.mrb[0].mxu0
    %v1800 = vadd.f32 %v1696, %v1799
    %v1801 = vpop.f32.mrb[0].mxu0
    %v1802 = vadd.f32 %v1700, %v1801
    %1803 = vdwg.mxu0
    %v1804 = vmul.f32 %v1782, %v1782
    %v1805 = vmul.f32 %v1784, %v1784
    %v1806 = vmul.f32 %v1788, %v1788
    %v1807 = vmul.f32 %v1790, %v1790
    %v1808 = vmul.f32 %v1794, %v1794
    %v1809 = vmul.f32 %v1796, %v1796
    %v1810 = vmul.f32 %v1800, %v1800
    %v1811 = vmul.f32 %v1802, %v1802
    %v1812 = vmul.f32 %v1782, %v1804
    %v1813 = vmul.f32 %v1784, %v1805
    %v1814 = vmul.f32 %v1788, %v1806
    %v1815 = vmul.f32 %v1790, %v1807
    %v1816 = vmul.f32 %v1794, %v1808
    %v1817 = vmul.f32 %v1796, %v1809
    %v1818 = vmul.f32 %v1800, %v1810
    %v1819 = vmul.f32 %v1802, %v1811
    %v1820 = vmul.f32 %v1812, 0.044715
    %v1821 = vmul.f32 %v1813, 0.044715
    %v1822 = vmul.f32 %v1814, 0.044715
    %v1823 = vmul.f32 %v1815, 0.044715
    %v1824 = vmul.f32 %v1816, 0.044715
    %v1825 = vmul.f32 %v1817, 0.044715
    %v1826 = vmul.f32 %v1818, 0.044715
    %v1827 = vmul.f32 %v1819, 0.044715
    %v1828 = vadd.f32 %v1782, %v1820
    %v1829 = vadd.f32 %v1784, %v1821
    %v1830 = vadd.f32 %v1788, %v1822
    %v1831 = vadd.f32 %v1790, %v1823
    %v1832 = vadd.f32 %v1794, %v1824
    %v1833 = vadd.f32 %v1796, %v1825
    %v1834 = vadd.f32 %v1800, %v1826
    %v1835 = vadd.f32 %v1802, %v1827
    %v1836 = vmul.f32 %v1828, 0.7978846
    %v1837 = vmul.f32 %v1829, 0.7978846
    %v1838 = vmul.f32 %v1830, 0.7978846
    %v1839 = vmul.f32 %v1831, 0.7978846
    %v1840 = vmul.f32 %v1832, 0.7978846
    %v1841 = vmul.f32 %v1833, 0.7978846
    %v1842 = vmul.f32 %v1834, 0.7978846
    %v1843 = vmul.f32 %v1835, 0.7978846
    %v1844 = vtanh.pop %v1836
    %v1845 = vtanh.pop %v1837
    %v1846 = vtanh.pop %v1838
    %v1847 = vtanh.pop %v1839
    %v1848 = vtanh.pop %v1840
    %v1849 = vtanh.pop %v1841
    %v1850 = vtanh.pop %v1842
    %v1851 = vtanh.pop %v1843
    %v1852 = vadd.f32 %v1844, 1.0
    %v1853 = vadd.f32 %v1845, 1.0
    %v1854 = vadd.f32 %v1846, 1.0
    %v1855 = vadd.f32 %v1847, 1.0
    %v1856 = vadd.f32 %v1848, 1.0
    %v1857 = vadd.f32 %v1849, 1.0
    %v1858 = vadd.f32 %v1850, 1.0
    %v1859 = vadd.f32 %v1851, 1.0
    %v1860 = vmul.f32 %v1852, 0.5
    %v1861 = vmul.f32 %v1853, 0.5
    %v1862 = vmul.f32 %v1854, 0.5
    %v1863 = vmul.f32 %v1855, 0.5
    %v1864 = vmul.f32 %v1856, 0.5
    %v1865 = vmul.f32 %v1857, 0.5
    %v1866 = vmul.f32 %v1858, 0.5
    %v1867 = vmul.f32 %v1859, 0.5
    %v1868 = vmul.f32 %v1782, %v1860
    %v1869 = vmul.f32 %v1784, %v1861
    %v1870 = vmul.f32 %v1788, %v1862
    %v1871 = vmul.f32 %v1790, %v1863
    %v1872 = vmul.f32 %v1794, %v1864
    %v1873 = vmul.f32 %v1796, %v1865
    %v1874 = vmul.f32 %v1800, %v1866
    %v1875 = vmul.f32 %v1802, %v1867
    %v1876 = vld [vmem:[%s12] sm:$0xff]
    %v1877 = vld [vmem:[%s12 + $0x8] sm:$0xff]
    %v1878 = vld [vmem:[%s12 + $0x10] sm:$0xff]
    %v1879 = vld [vmem:[%s12 + $0x18] sm:$0xff]
    %v1880 = vld [vmem:[%s12 + $0x20] sm:$0xff]
    %v1881 = vld [vmem:[%s12 + $0x28] sm:$0xff]
    %v1882 = vld [vmem:[%s12 + $0x30] sm:$0xff]
    %v1883 = vld [vmem:[%s12 + $0x38] sm:$0xff]
    %v1884 = vld [vmem:[%s12 + $0x40] sm:$0xff]
    %v1885 = vld [vmem:[%s12 + $0x48] sm:$0xff]
    %v1886 = vld [vmem:[%s12 + $0x50] sm:$0xff]
    %v1887 = vld [vmem:[%s12 + $0x58] sm:$0xff]
    %v1888 = vld [vmem:[%s12 + $0x60] sm:$0xff]
    %v1889 = vld [vmem:[%s12 + $0x68] sm:$0xff]
    %v1890 = vld [vmem:[%s12 + $0x70] sm:$0xff]
    %v1891 = vld [vmem:[%s12 + $0x78] sm:$0xff]
    %v1892 = vld [vmem:[%s12 + $0x80] sm:$0xff]
    %v1893 = vld [vmem:[%s12 + $0x88] sm:$0xff]
    %v1894 = vld [vmem:[%s12 + $0x90] sm:$0xff]
    %v1895 = vld [vmem:[%s12 + $0x98] sm:$0xff]
    %v1896 = vld [vmem:[%s12 + $0xa0] sm:$0xff]
    %v1897 = vld [vmem:[%s12 + $0xa8] sm:$0xff]
    %v1898 = vld [vmem:[%s12 + $0xb0] sm:$0xff]
    %v1899 = vld [vmem:[%s12 + $0xb8] sm:$0xff]
    %v1900 = vld [vmem:[%s12 + $0xc0] sm:$0xff]
    %v1901 = vld [vmem:[%s12 + $0xc8] sm:$0xff]
    %v1902 = vld [vmem:[%s12 + $0xd0] sm:$0xff]
    %v1903 = vld [vmem:[%s12 + $0xd8] sm:$0xff]
    %v1904 = vld [vmem:[%s12 + $0xe0] sm:$0xff]
    %v1905 = vld [vmem:[%s12 + $0xe8] sm:$0xff]
    %v1906 = vld [vmem:[%s12 + $0xf0] sm:$0xff]
    %v1907 = vld [vmem:[%s12 + $0xf8] sm:$0xff]
    %v1908 = vld [vmem:[%s13] sm:$0x1]
    %v1910 = vlaneseq
    %v1911 = vshrl.u32 %v1910, 7
    %v1912 = vsub.s32 0, %v1911
    %v1913 = vrot.slane %v1908, %v1912
    %1915 = vmatprep.subr.mxu0 0.0
    %1916 = vmatpush1.msra.mxu0 %v1876
    %1917 = vmatprep.subr.mxu0 0.0
    %1918 = vmatpush1.msra.mxu0 %v1877
    %1919 = vmatprep.subr.mxu0 0.0
    %1920 = vmatpush1.msra.mxu0 %v1878
    %1921 = vmatprep.subr.mxu0 0.0
    %1922 = vmatpush1.msra.mxu0 %v1879
    %1923 = vmatprep.subr.mxu0 0.0
    %1924 = vmatpush1.msra.mxu0 %v1880
    %1925 = vmatprep.subr.mxu0 0.0
    %1926 = vmatpush1.msra.mxu0 %v1881
    %1927 = vmatprep.subr.mxu0 0.0
    %1928 = vmatpush1.msra.mxu0 %v1882
    %1929 = vmatprep.subr.mxu0 0.0
    %1930 = vmatpush1.msra.mxu0 %v1883
    %1931 = vmatprep.subr.mxu0 0.0
    %1932 = vmatpush1.msra.mxu0 %v1884
    %1933 = vmatprep.subr.mxu0 0.0
    %1934 = vmatpush1.msra.mxu0 %v1885
    %1935 = vmatprep.subr.mxu0 0.0
    %1936 = vmatpush1.msra.mxu0 %v1886
    %1937 = vmatprep.subr.mxu0 0.0
    %1938 = vmatpush1.msra.mxu0 %v1887
    %1939 = vmatprep.subr.mxu0 0.0
    %1940 = vmatpush1.msra.mxu0 %v1888
    %1941 = vmatprep.subr.mxu0 0.0
    %1942 = vmatpush1.msra.mxu0 %v1889
    %1943 = vmatprep.subr.mxu0 0.0
    %1944 = vmatpush1.msra.mxu0 %v1890
    %1945 = vmatprep.subr.mxu0 0.0
    %1946 = vmatpush1.msra.mxu0 %v1891
    %1947 = vmatprep.subr.mxu0 0.0
    %1948 = vmatpush1.msra.mxu0 %v1892
    %1949 = vmatprep.subr.mxu0 0.0
    %1950 = vmatpush1.msra.mxu0 %v1893
    %1951 = vmatprep.subr.mxu0 0.0
    %1952 = vmatpush1.msra.mxu0 %v1894
    %1953 = vmatprep.subr.mxu0 0.0
    %1954 = vmatpush1.msra.mxu0 %v1895
    %1955 = vmatprep.subr.mxu0 0.0
    %1956 = vmatpush1.msra.mxu0 %v1896
    %1957 = vmatprep.subr.mxu0 0.0
    %1958 = vmatpush1.msra.mxu0 %v1897
    %1959 = vmatprep.subr.mxu0 0.0
    %1960 = vmatpush1.msra.mxu0 %v1898
    %1961 = vmatprep.subr.mxu0 0.0
    %1962 = vmatpush1.msra.mxu0 %v1899
    %1963 = vmatprep.subr.mxu0 0.0
    %1964 = vmatpush1.msra.mxu0 %v1900
    %1965 = vmatprep.subr.mxu0 0.0
    %1966 = vmatpush1.msra.mxu0 %v1901
    %1967 = vmatprep.subr.mxu0 0.0
    %1968 = vmatpush1.msra.mxu0 %v1902
    %1969 = vmatprep.subr.mxu0 0.0
    %1970 = vmatpush1.msra.mxu0 %v1903
    %1971 = vmatprep.subr.mxu0 0.0
    %1972 = vmatpush1.msra.mxu0 %v1904
    %1973 = vmatprep.subr.mxu0 0.0
    %1974 = vmatpush1.msra.mxu0 %v1905
    %1975 = vmatprep.subr.mxu0 0.0
    %1976 = vmatpush1.msra.mxu0 %v1906
    %1977 = vmatprep.subr.mxu0 0.0
    %1978 = vmatpush1.msra.mxu0 %v1907
    %1979 = vmatprep.mubr.f32.mxu0 %v1869
    %1980 = vmatmul.mubr.f32.gmra.mrb[0].mxu0 %v1868
    %v1981 = vpop.f32.mrb[0].mxu0
    %v1982 = vadd.f32 %v1913, %v1981
    %v1983 = vpop.f32.mrb[0].mxu0
    %1984 = vmatprep.mubr.f32.mxu0 %v1871
    %1985 = vmatmul.mubr.f32.gmra.mrb[0].mxu0 %v1870
    %v1986 = vpop.f32.mrb[0].mxu0
    %v1987 = vadd.f32 %v1913, %v1986
    %v1988 = vpop.f32.mrb[0].mxu0
    %1989 = vmatprep.mubr.f32.mxu0 %v1873
    %1990 = vmatmul.mubr.f32.gmra.mrb[0].mxu0 %v1872
    %v1991 = vpop.f32.mrb[0].mxu0
    %v1992 = vadd.f32 %v1913, %v1991
    %v1993 = vpop.f32.mrb[0].mxu0
    %1994 = vmatprep.mubr.f32.mxu0 %v1875
    %1995 = vmatmul.mubr.f32.gmra.mrb[0].mxu0 %v1874
    %v1996 = vpop.f32.mrb[0].mxu0
    %v1997 = vadd.f32 %v1913, %v1996
    %v1998 = vpop.f32.mrb[0].mxu0
    %1999 = vdwg.mxu0
    %v2000 = vadd.f32 %v1597, %v1982
    %v2001 = vadd.f32 %v1598, %v1987
    %v2002 = vadd.f32 %v1599, %v1992
    %v2003 = vadd.f32 %v1600, %v1997
    %2004 = vst.msk [vmem:[#allocation8] sm:$0xff] %vm93, %v2000
    %2005 = vst.msk [vmem:[#allocation8 + $0x8] sm:$0xff] %vm93, %v2001
    %2006 = vst.msk [vmem:[#allocation8 + $0x10] sm:$0xff] %vm93, %v2002
    %2007 = vst.msk [vmem:[#allocation8 + $0x18] sm:$0xff] %vm93, %v2003
    // Predicated region
    $region70: #{block_forward.1} parent=1 // pred_check
      _
    $region71: #{block_forward.1} parent=1 // pred_check_branch
      %2009 = sbr.rel (0) target = $region73
    $region72: #{block_forward.1} parent=1 // pred_region
      %s2011 = ssub.s32 512, 512
      %2012 = vsyncadd [#allocation4], %s2011
      %s2013 = sshll.u32 [#allocation8], 4
      %s2014 = int_to_ptr.vmem [resolvable:$true] %s2013
      %2019 = dma.vmem_to_hbm [thread:$0]  %s2014, 512, %s14, [#allocation4], 128, 128, 8
    $region73: #{block_forward.1} parent=1 // pred_fallthru
      _
    // Predicated region
    $region74: #{block_forward.1} parent=1 // pred_check
      _
    $region75: #{block_forward.1} parent=1 // pred_check_branch
      %2021 = sbr.rel (0) target = $region77
    $region76: #{block_forward.1} parent=1 // pred_region
      %2022 = dma.done [#allocation4], 512
    $region77: #{block_forward.1} parent=1 // pred_fallthru
      _
    %2023 = vsyncpa [#allocation3], 1
    %2024 = vsyncpa [#allocation6], 1
    %2025 = vsyncpa [#allocation4], 1

</llo_original>
